<compile_context>
chip_gen: v7x
topology: tpu7x:2x2x1
jax: 0.10.0
libtpu: 0.0.40
codegen_flags: <defaults>
</compile_context>

<pallas_src>
import jax
import jax.numpy as jnp
import numpy as np
from jax.experimental import pallas as pl
from jax.experimental.pallas import tpu as pltpu


# ---------------------------------------------------------------------------
# Fused whole-network Pallas kernel (built per static block configuration)
# ---------------------------------------------------------------------------
def _make_stack_kernel(block_cfgs, B, L, K):
    """block_cfgs: tuple of (cin, cout, dilation, has_down) per TemporalBlock."""
    BL = B * L

    def kernel(*refs):
        x_ref, t_ref = refs[0], refs[1]
        idx = 2
        per_block = []
        for (_, _, _, has_down) in block_cfgs:
            n = 6 if has_down else 4
            per_block.append(refs[idx:idx + n])
            idx += n
        lin_w_ref, lin_b_ref, out_ref = refs[idx], refs[idx + 1], refs[idx + 2]

        t_row = t_ref[...]                      # (BL, 1) int32: time index per row
        cur = x_ref[...].astype(jnp.float32)    # (BL, cin0), batch folded into rows

        def causal_conv(val, w_ref, b_ref, d):
            # y[t] = b + sum_k w[k] @ val[t - (K-1-k)*d]  (zero outside sequence).
            # Taps are register-resident: sublane roll + per-row time mask; the
            # mask also zeroes rows that would wrap across sequence boundaries.
            acc = None
            for k in range(K):
                s = (K - 1 - k) * d
                if s == 0:
                    tap = val
                else:
                    tap = jnp.where(t_row >= s,
                                    pltpu.roll(val, shift=s, axis=0), 0.0)
                term = jnp.dot(tap, w_ref[k], preferred_element_type=jnp.float32)
                acc = term if acc is None else acc + term
            return acc + b_ref[...]

        for (cin, cout, d, has_down), wr in zip(block_cfgs, per_block):
            if has_down:
                w1, b1, w2, b2, wd, bd = wr
                res = jnp.dot(cur, wd[...],
                              preferred_element_type=jnp.float32) + bd[...]
            else:
                w1, b1, w2, b2 = wr
                res = cur
            h = jnp.maximum(causal_conv(cur, w1, b1, d), 0.0)
            h = jnp.maximum(causal_conv(h, w2, b2, d), 0.0)
            cur = jnp.maximum(h + res, 0.0)

        # Pick row b*L + (L-1) of every sequence with a tiny selection matmul
        # (avoids in-register reshapes / strided gathers).
        r = jax.lax.broadcasted_iota(jnp.int32, (B, BL), 1)
        want = jax.lax.broadcasted_iota(jnp.int32, (B, BL), 0) * L + (L - 1)
        sel = (r == want).astype(jnp.float32)                         # (B, BL)
        last = jnp.dot(sel, cur, preferred_element_type=jnp.float32)  # (B, C_last)

        # Fused head Linear.
        y = jnp.dot(last, lin_w_ref[...],
                    preferred_element_type=jnp.float32) + lin_b_ref[...]
        out_ref[...] = y.astype(out_ref.dtype)

    return kernel


# ---------------------------------------------------------------------------
# Wrapper: one grid-less pallas_call for the whole network
# ---------------------------------------------------------------------------
def tcn_forward(x_ncl, params):
    """x_ncl: (B, input_size, L) PyTorch NCL layout. Returns (B, output_size)."""
    B, cin0, L = x_ncl.shape
    blocks = params["blocks"]
    K = blocks[0]["w1"].shape[0]

    # NCL -> NLC -> (B*L, Cin) rows. Tiny layout op left to XLA (fused with the
    # call); in-kernel transposes of sub-(8,128) tiles are riskier than useful.
    x_flat = jnp.transpose(x_ncl, (0, 2, 1)).reshape(B * L, cin0)
    # Per-row time index, used for causal masking of rolled taps.
    t_row = (jnp.arange(B * L, dtype=jnp.int32) % L).reshape(B * L, 1)

    block_cfgs = []
    flat_inputs = [x_flat, t_row]
    in_c = cin0
    for i, blk in enumerate(blocks):
        d = 2 ** i
        Kc, cin, cout = blk["w1"].shape
        assert Kc == K and cin == in_c
        has_down = blk["wd"] is not None
        block_cfgs.append((cin, cout, d, has_down))
        flat_inputs += [blk["w1"], blk["b1"].reshape(1, cout),
                        blk["w2"], blk["b2"].reshape(1, cout)]
        if has_down:
            flat_inputs += [blk["wd"].reshape(cin, cout),
                            blk["bd"].reshape(1, cout)]
        in_c = cout

    out_size = params["lin_w"].shape[1]
    flat_inputs += [params["lin_w"], params["lin_b"].reshape(1, out_size)]

    kernel = _make_stack_kernel(tuple(block_cfgs), B, L, K)
    # No grid: one kernel invocation; all weights + activations resident in VMEM
    # (< 100 KiB at these shapes).
    # TODO(synk): at production sizes, set vmem_limit_bytes and cast MXU
    #             operands to bf16 on v6e/v7x.
    return pl.pallas_call(
        kernel,
        out_shape=jax.ShapeDtypeStruct((B, out_size), x_ncl.dtype),
    )(*flat_inputs)


# ---------------------------------------------------------------------------
# Pure-JAX reference (for correctness check)
# ---------------------------------------------------------------------------
def _conv_ref(x, w, b, dilation):
    B, L, Cin = x.shape
    Kk, _, Cout = w.shape
    pad = (Kk - 1) * dilation
    xpad = jnp.pad(x, ((0, 0), (pad, 0), (0, 0)))
    out = jnp.broadcast_to(b[None, None, :], (B, L, Cout)).astype(jnp.float32)
    for k in range(Kk):
        out = out + jnp.einsum("blc,cd->bld",
                               xpad[:, k * dilation:k * dilation + L, :], w[k])
    return out


def tcn_reference(x_ncl, params):
    x = jnp.transpose(x_ncl, (0, 2, 1))
    for i, blk in enumerate(params["blocks"]):
        d = 2 ** i
        h1 = jnp.maximum(_conv_ref(x, blk["w1"], blk["b1"], d), 0.0)
        h2 = jnp.maximum(_conv_ref(h1, blk["w2"], blk["b2"], d), 0.0)
        res = x if blk["wd"] is None else _conv_ref(x, blk["wd"], blk["bd"], 1)
        x = jnp.maximum(h2 + res, 0.0)
    last = x[:, -1, :]
    return last @ params["lin_w"] + params["lin_b"]


# ---------------------------------------------------------------------------
# Deterministic parameter construction (weight-norm at inference == plain weight)
# ---------------------------------------------------------------------------
def init_params(key, input_size, output_size, num_channels, kernel_size):
    params = {"blocks": []}
    in_c = input_size
    for out_c in num_channels:
        key, k1, k2, k3, k4, k5, k6 = jax.random.split(key, 7)
        blk = {
            "w1": 0.1 * jax.random.normal(k1, (kernel_size, in_c, out_c), jnp.float32),
            "b1": 0.1 * jax.random.normal(k2, (out_c,), jnp.float32),
            "w2": 0.1 * jax.random.normal(k3, (kernel_size, out_c, out_c), jnp.float32),
            "b2": 0.1 * jax.random.normal(k4, (out_c,), jnp.float32),
        }
        if in_c != out_c:
            blk["wd"] = 0.1 * jax.random.normal(k5, (1, in_c, out_c), jnp.float32)
            blk["bd"] = 0.1 * jax.random.normal(k6, (out_c,), jnp.float32)
        else:
            blk["wd"] = None
            blk["bd"] = None
        params["blocks"].append(blk)
        in_c = out_c
    key, k7, k8 = jax.random.split(key, 3)
    # nn.Linear(num_channels[-1], output_size): weight ~ N(0, 0.01)
    params["lin_w"] = 0.01 * jax.random.normal(
        k7, (num_channels[-1], output_size), jnp.float32)
    params["lin_b"] = 0.1 * jax.random.normal(k8, (output_size,), jnp.float32)
    return params


if __name__ == "__main__":
    # Adding-problem-like config at small shapes.
    B, input_size, seq_len = 2, 2, 16
    num_channels = [8, 8]
    kernel_size = 3
    output_size = 1

    key = jax.random.PRNGKey(0)
    key, kx = jax.random.split(key)
    x = jax.random.normal(kx, (B, input_size, seq_len), jnp.float32)  # NCL
    params = init_params(key, input_size, output_size, num_channels, kernel_size)

    y = jax.block_until_ready(jax.jit(tcn_forward)(x, params))
    y_ref = jax.block_until_ready(tcn_reference(x, params))

    assert y.shape == (B, output_size), y.shape
    np.testing.assert_allclose(np.asarray(y), np.asarray(y_ref),
                               rtol=1e-5, atol=1e-5)
    print("KERNEL_OK")
</pallas_src>

<mosaic_0001>
module attributes {stable_mosaic.version = 11 : i64} {
  func.func @kernel(%arg0: memref<32x2xf32, #tpu.memory_space<vmem>>, %arg1: memref<32x1xi32, #tpu.memory_space<vmem>>, %arg2: memref<3x2x8xf32, #tpu.memory_space<vmem>>, %arg3: memref<1x8xf32, #tpu.memory_space<vmem>>, %arg4: memref<3x8x8xf32, #tpu.memory_space<vmem>>, %arg5: memref<1x8xf32, #tpu.memory_space<vmem>>, %arg6: memref<2x8xf32, #tpu.memory_space<vmem>>, %arg7: memref<1x8xf32, #tpu.memory_space<vmem>>, %arg8: memref<3x8x8xf32, #tpu.memory_space<vmem>>, %arg9: memref<1x8xf32, #tpu.memory_space<vmem>>, %arg10: memref<3x8x8xf32, #tpu.memory_space<vmem>>, %arg11: memref<1x8xf32, #tpu.memory_space<vmem>>, %arg12: memref<8x1xf32, #tpu.memory_space<vmem>>, %arg13: memref<1x1xf32, #tpu.memory_space<vmem>>, %arg14: memref<2x1xf32, #tpu.memory_space<vmem>>) attributes {dimension_semantics = [], scalar_prefetch = 0 : i64, scratch_operands = 0 : i64, tpu.core_type = #tpu.core_type<tc>} {
    %c0 = arith.constant 0 : index
    %c0_0 = arith.constant 0 : index
    %0 = vector.load %arg1[%c0, %c0_0] : memref<32x1xi32, #tpu.memory_space<vmem>>, vector<32x1xi32>
    %c0_1 = arith.constant 0 : index
    %c0_2 = arith.constant 0 : index
    %1 = vector.load %arg0[%c0_1, %c0_2] : memref<32x2xf32, #tpu.memory_space<vmem>>, vector<32x2xf32>
    %c0_3 = arith.constant 0 : index
    %c0_4 = arith.constant 0 : index
    %2 = vector.load %arg6[%c0_3, %c0_4] : memref<2x8xf32, #tpu.memory_space<vmem>>, vector<2x8xf32>
    %cst = arith.constant dense<0.000000e+00> : vector<32x8xf32>
    %3 = tpu.matmul %1, %2, %cst {dimension_numbers = #tpu.dot_dimension_numbers<[1], [0], [0], [1], [0, 0, 1, 1], [], []>} : vector<32x2xf32>, vector<2x8xf32>, vector<32x8xf32> -> vector<32x8xf32>
    %c0_5 = arith.constant 0 : index
    %c0_6 = arith.constant 0 : index
    %4 = vector.load %arg7[%c0_5, %c0_6] : memref<1x8xf32, #tpu.memory_space<vmem>>, vector<1x8xf32>
    %5 = vector.broadcast %4 : vector<1x8xf32> to vector<32x8xf32>
    %6 = arith.addf %3, %5 : vector<32x8xf32>
    %c2_i32 = arith.constant 2 : i32
    %7 = vector.broadcast %c2_i32 : i32 to vector<32x1xi32>
    %8 = arith.cmpi sge, %0, %7 : vector<32x1xi32>
    %c2_i32_7 = arith.constant 2 : i32
    %9 = tpu.dynamic_rotate %1 by %c2_i32_7 dim 0 : vector<32x2xf32>, i32 -> vector<32x2xf32>
    %cst_8 = arith.constant 0.000000e+00 : f32
    %10 = vector.shape_cast %8 : vector<32x1xi1> to vector<32x1xi1>
    %11 = vector.broadcast %10 : vector<32x1xi1> to vector<32x2xi1>
    %12 = vector.broadcast %cst_8 : f32 to vector<32x2xf32>
    %13 = arith.select %11, %9, %12 : vector<32x2xi1>, vector<32x2xf32>
    %c0_9 = arith.constant 0 : index
    %c0_10 = arith.constant 0 : index
    %c0_11 = arith.constant 0 : index
    %14 = vector.load %arg2[%c0_9, %c0_10, %c0_11] : memref<3x2x8xf32, #tpu.memory_space<vmem>>, vector<1x2x8xf32>
    %15 = vector.shape_cast %14 : vector<1x2x8xf32> to vector<2x8xf32>
    %cst_12 = arith.constant dense<0.000000e+00> : vector<32x8xf32>
    %16 = tpu.matmul %13, %15, %cst_12 {dimension_numbers = #tpu.dot_dimension_numbers<[1], [0], [0], [1], [0, 0, 1, 1], [], []>} : vector<32x2xf32>, vector<2x8xf32>, vector<32x8xf32> -> vector<32x8xf32>
    %c1_i32 = arith.constant 1 : i32
    %17 = vector.broadcast %c1_i32 : i32 to vector<32x1xi32>
    %18 = arith.cmpi sge, %0, %17 : vector<32x1xi32>
    %c1_i32_13 = arith.constant 1 : i32
    %19 = tpu.dynamic_rotate %1 by %c1_i32_13 dim 0 : vector<32x2xf32>, i32 -> vector<32x2xf32>
    %cst_14 = arith.constant 0.000000e+00 : f32
    %20 = vector.shape_cast %18 : vector<32x1xi1> to vector<32x1xi1>
    %21 = vector.broadcast %20 : vector<32x1xi1> to vector<32x2xi1>
    %22 = vector.broadcast %cst_14 : f32 to vector<32x2xf32>
    %23 = arith.select %21, %19, %22 : vector<32x2xi1>, vector<32x2xf32>
    %c1 = arith.constant 1 : index
    %c0_15 = arith.constant 0 : index
    %c0_16 = arith.constant 0 : index
    %24 = vector.load %arg2[%c1, %c0_15, %c0_16] : memref<3x2x8xf32, #tpu.memory_space<vmem>>, vector<1x2x8xf32>
    %25 = vector.shape_cast %24 : vector<1x2x8xf32> to vector<2x8xf32>
    %cst_17 = arith.constant dense<0.000000e+00> : vector<32x8xf32>
    %26 = tpu.matmul %23, %25, %cst_17 {dimension_numbers = #tpu.dot_dimension_numbers<[1], [0], [0], [1], [0, 0, 1, 1], [], []>} : vector<32x2xf32>, vector<2x8xf32>, vector<32x8xf32> -> vector<32x8xf32>
    %27 = arith.addf %16, %26 : vector<32x8xf32>
    %c2 = arith.constant 2 : index
    %c0_18 = arith.constant 0 : index
    %c0_19 = arith.constant 0 : index
    %28 = vector.load %arg2[%c2, %c0_18, %c0_19] : memref<3x2x8xf32, #tpu.memory_space<vmem>>, vector<1x2x8xf32>
    %29 = vector.shape_cast %28 : vector<1x2x8xf32> to vector<2x8xf32>
    %cst_20 = arith.constant dense<0.000000e+00> : vector<32x8xf32>
    %30 = tpu.matmul %1, %29, %cst_20 {dimension_numbers = #tpu.dot_dimension_numbers<[1], [0], [0], [1], [0, 0, 1, 1], [], []>} : vector<32x2xf32>, vector<2x8xf32>, vector<32x8xf32> -> vector<32x8xf32>
    %31 = arith.addf %27, %30 : vector<32x8xf32>
    %c0_21 = arith.constant 0 : index
    %c0_22 = arith.constant 0 : index
    %32 = vector.load %arg3[%c0_21, %c0_22] : memref<1x8xf32, #tpu.memory_space<vmem>>, vector<1x8xf32>
    %33 = vector.broadcast %32 : vector<1x8xf32> to vector<32x8xf32>
    %34 = arith.addf %31, %33 : vector<32x8xf32>
    %cst_23 = arith.constant 0.000000e+00 : f32
    %35 = vector.broadcast %cst_23 : f32 to vector<32x8xf32>
    %36 = arith.maximumf %34, %35 : vector<32x8xf32>
    %c2_i32_24 = arith.constant 2 : i32
    %37 = vector.broadcast %c2_i32_24 : i32 to vector<32x1xi32>
    %38 = arith.cmpi sge, %0, %37 : vector<32x1xi32>
    %c2_i32_25 = arith.constant 2 : i32
    %39 = tpu.dynamic_rotate %36 by %c2_i32_25 dim 0 : vector<32x8xf32>, i32 -> vector<32x8xf32>
    %cst_26 = arith.constant 0.000000e+00 : f32
    %40 = vector.shape_cast %38 : vector<32x1xi1> to vector<32x1xi1>
    %41 = vector.broadcast %40 : vector<32x1xi1> to vector<32x8xi1>
    %42 = vector.broadcast %cst_26 : f32 to vector<32x8xf32>
    %43 = arith.select %41, %39, %42 : vector<32x8xi1>, vector<32x8xf32>
    %c0_27 = arith.constant 0 : index
    %c0_28 = arith.constant 0 : index
    %c0_29 = arith.constant 0 : index
    %44 = vector.load %arg4[%c0_27, %c0_28, %c0_29] : memref<3x8x8xf32, #tpu.memory_space<vmem>>, vector<1x8x8xf32>
    %45 = vector.shape_cast %44 : vector<1x8x8xf32> to vector<8x8xf32>
    %cst_30 = arith.constant dense<0.000000e+00> : vector<32x8xf32>
    %46 = tpu.matmul %43, %45, %cst_30 {dimension_numbers = #tpu.dot_dimension_numbers<[1], [0], [0], [1], [0, 0, 1, 1], [], []>} : vector<32x8xf32>, vector<8x8xf32>, vector<32x8xf32> -> vector<32x8xf32>
    %c1_i32_31 = arith.constant 1 : i32
    %47 = vector.broadcast %c1_i32_31 : i32 to vector<32x1xi32>
    %48 = arith.cmpi sge, %0, %47 : vector<32x1xi32>
    %c1_i32_32 = arith.constant 1 : i32
    %49 = tpu.dynamic_rotate %36 by %c1_i32_32 dim 0 : vector<32x8xf32>, i32 -> vector<32x8xf32>
    %cst_33 = arith.constant 0.000000e+00 : f32
    %50 = vector.shape_cast %48 : vector<32x1xi1> to vector<32x1xi1>
    %51 = vector.broadcast %50 : vector<32x1xi1> to vector<32x8xi1>
    %52 = vector.broadcast %cst_33 : f32 to vector<32x8xf32>
    %53 = arith.select %51, %49, %52 : vector<32x8xi1>, vector<32x8xf32>
    %c1_34 = arith.constant 1 : index
    %c0_35 = arith.constant 0 : index
    %c0_36 = arith.constant 0 : index
    %54 = vector.load %arg4[%c1_34, %c0_35, %c0_36] : memref<3x8x8xf32, #tpu.memory_space<vmem>>, vector<1x8x8xf32>
    %55 = vector.shape_cast %54 : vector<1x8x8xf32> to vector<8x8xf32>
    %cst_37 = arith.constant dense<0.000000e+00> : vector<32x8xf32>
    %56 = tpu.matmul %53, %55, %cst_37 {dimension_numbers = #tpu.dot_dimension_numbers<[1], [0], [0], [1], [0, 0, 1, 1], [], []>} : vector<32x8xf32>, vector<8x8xf32>, vector<32x8xf32> -> vector<32x8xf32>
    %57 = arith.addf %46, %56 : vector<32x8xf32>
    %c2_38 = arith.constant 2 : index
    %c0_39 = arith.constant 0 : index
    %c0_40 = arith.constant 0 : index
    %58 = vector.load %arg4[%c2_38, %c0_39, %c0_40] : memref<3x8x8xf32, #tpu.memory_space<vmem>>, vector<1x8x8xf32>
    %59 = vector.shape_cast %58 : vector<1x8x8xf32> to vector<8x8xf32>
    %cst_41 = arith.constant dense<0.000000e+00> : vector<32x8xf32>
    %60 = tpu.matmul %36, %59, %cst_41 {dimension_numbers = #tpu.dot_dimension_numbers<[1], [0], [0], [1], [0, 0, 1, 1], [], []>} : vector<32x8xf32>, vector<8x8xf32>, vector<32x8xf32> -> vector<32x8xf32>
    %61 = arith.addf %57, %60 : vector<32x8xf32>
    %c0_42 = arith.constant 0 : index
    %c0_43 = arith.constant 0 : index
    %62 = vector.load %arg5[%c0_42, %c0_43] : memref<1x8xf32, #tpu.memory_space<vmem>>, vector<1x8xf32>
    %63 = vector.broadcast %62 : vector<1x8xf32> to vector<32x8xf32>
    %64 = arith.addf %61, %63 : vector<32x8xf32>
    %cst_44 = arith.constant 0.000000e+00 : f32
    %65 = vector.broadcast %cst_44 : f32 to vector<32x8xf32>
    %66 = arith.maximumf %64, %65 : vector<32x8xf32>
    %67 = arith.addf %66, %6 : vector<32x8xf32>
    %cst_45 = arith.constant 0.000000e+00 : f32
    %68 = vector.broadcast %cst_45 : f32 to vector<32x8xf32>
    %69 = arith.maximumf %67, %68 : vector<32x8xf32>
    %c4_i32 = arith.constant 4 : i32
    %70 = vector.broadcast %c4_i32 : i32 to vector<32x1xi32>
    %71 = arith.cmpi sge, %0, %70 : vector<32x1xi32>
    %c4_i32_46 = arith.constant 4 : i32
    %72 = tpu.dynamic_rotate %69 by %c4_i32_46 dim 0 : vector<32x8xf32>, i32 -> vector<32x8xf32>
    %cst_47 = arith.constant 0.000000e+00 : f32
    %73 = vector.shape_cast %71 : vector<32x1xi1> to vector<32x1xi1>
    %74 = vector.broadcast %73 : vector<32x1xi1> to vector<32x8xi1>
    %75 = vector.broadcast %cst_47 : f32 to vector<32x8xf32>
    %76 = arith.select %74, %72, %75 : vector<32x8xi1>, vector<32x8xf32>
    %c0_48 = arith.constant 0 : index
    %c0_49 = arith.constant 0 : index
    %c0_50 = arith.constant 0 : index
    %77 = vector.load %arg8[%c0_48, %c0_49, %c0_50] : memref<3x8x8xf32, #tpu.memory_space<vmem>>, vector<1x8x8xf32>
    %78 = vector.shape_cast %77 : vector<1x8x8xf32> to vector<8x8xf32>
    %cst_51 = arith.constant dense<0.000000e+00> : vector<32x8xf32>
    %79 = tpu.matmul %76, %78, %cst_51 {dimension_numbers = #tpu.dot_dimension_numbers<[1], [0], [0], [1], [0, 0, 1, 1], [], []>} : vector<32x8xf32>, vector<8x8xf32>, vector<32x8xf32> -> vector<32x8xf32>
    %c2_i32_52 = arith.constant 2 : i32
    %80 = vector.broadcast %c2_i32_52 : i32 to vector<32x1xi32>
    %81 = arith.cmpi sge, %0, %80 : vector<32x1xi32>
    %c2_i32_53 = arith.constant 2 : i32
    %82 = tpu.dynamic_rotate %69 by %c2_i32_53 dim 0 : vector<32x8xf32>, i32 -> vector<32x8xf32>
    %cst_54 = arith.constant 0.000000e+00 : f32
    %83 = vector.shape_cast %81 : vector<32x1xi1> to vector<32x1xi1>
    %84 = vector.broadcast %83 : vector<32x1xi1> to vector<32x8xi1>
    %85 = vector.broadcast %cst_54 : f32 to vector<32x8xf32>
    %86 = arith.select %84, %82, %85 : vector<32x8xi1>, vector<32x8xf32>
    %c1_55 = arith.constant 1 : index
    %c0_56 = arith.constant 0 : index
    %c0_57 = arith.constant 0 : index
    %87 = vector.load %arg8[%c1_55, %c0_56, %c0_57] : memref<3x8x8xf32, #tpu.memory_space<vmem>>, vector<1x8x8xf32>
    %88 = vector.shape_cast %87 : vector<1x8x8xf32> to vector<8x8xf32>
    %cst_58 = arith.constant dense<0.000000e+00> : vector<32x8xf32>
    %89 = tpu.matmul %86, %88, %cst_58 {dimension_numbers = #tpu.dot_dimension_numbers<[1], [0], [0], [1], [0, 0, 1, 1], [], []>} : vector<32x8xf32>, vector<8x8xf32>, vector<32x8xf32> -> vector<32x8xf32>
    %90 = arith.addf %79, %89 : vector<32x8xf32>
    %c2_59 = arith.constant 2 : index
    %c0_60 = arith.constant 0 : index
    %c0_61 = arith.constant 0 : index
    %91 = vector.load %arg8[%c2_59, %c0_60, %c0_61] : memref<3x8x8xf32, #tpu.memory_space<vmem>>, vector<1x8x8xf32>
    %92 = vector.shape_cast %91 : vector<1x8x8xf32> to vector<8x8xf32>
    %cst_62 = arith.constant dense<0.000000e+00> : vector<32x8xf32>
    %93 = tpu.matmul %69, %92, %cst_62 {dimension_numbers = #tpu.dot_dimension_numbers<[1], [0], [0], [1], [0, 0, 1, 1], [], []>} : vector<32x8xf32>, vector<8x8xf32>, vector<32x8xf32> -> vector<32x8xf32>
    %94 = arith.addf %90, %93 : vector<32x8xf32>
    %c0_63 = arith.constant 0 : index
    %c0_64 = arith.constant 0 : index
    %95 = vector.load %arg9[%c0_63, %c0_64] : memref<1x8xf32, #tpu.memory_space<vmem>>, vector<1x8xf32>
    %96 = vector.broadcast %95 : vector<1x8xf32> to vector<32x8xf32>
    %97 = arith.addf %94, %96 : vector<32x8xf32>
    %cst_65 = arith.constant 0.000000e+00 : f32
    %98 = vector.broadcast %cst_65 : f32 to vector<32x8xf32>
    %99 = arith.maximumf %97, %98 : vector<32x8xf32>
    %c4_i32_66 = arith.constant 4 : i32
    %100 = vector.broadcast %c4_i32_66 : i32 to vector<32x1xi32>
    %101 = arith.cmpi sge, %0, %100 : vector<32x1xi32>
    %c4_i32_67 = arith.constant 4 : i32
    %102 = tpu.dynamic_rotate %99 by %c4_i32_67 dim 0 : vector<32x8xf32>, i32 -> vector<32x8xf32>
    %cst_68 = arith.constant 0.000000e+00 : f32
    %103 = vector.shape_cast %101 : vector<32x1xi1> to vector<32x1xi1>
    %104 = vector.broadcast %103 : vector<32x1xi1> to vector<32x8xi1>
    %105 = vector.broadcast %cst_68 : f32 to vector<32x8xf32>
    %106 = arith.select %104, %102, %105 : vector<32x8xi1>, vector<32x8xf32>
    %c0_69 = arith.constant 0 : index
    %c0_70 = arith.constant 0 : index
    %c0_71 = arith.constant 0 : index
    %107 = vector.load %arg10[%c0_69, %c0_70, %c0_71] : memref<3x8x8xf32, #tpu.memory_space<vmem>>, vector<1x8x8xf32>
    %108 = vector.shape_cast %107 : vector<1x8x8xf32> to vector<8x8xf32>
    %cst_72 = arith.constant dense<0.000000e+00> : vector<32x8xf32>
    %109 = tpu.matmul %106, %108, %cst_72 {dimension_numbers = #tpu.dot_dimension_numbers<[1], [0], [0], [1], [0, 0, 1, 1], [], []>} : vector<32x8xf32>, vector<8x8xf32>, vector<32x8xf32> -> vector<32x8xf32>
    %c2_i32_73 = arith.constant 2 : i32
    %110 = vector.broadcast %c2_i32_73 : i32 to vector<32x1xi32>
    %111 = arith.cmpi sge, %0, %110 : vector<32x1xi32>
    %c2_i32_74 = arith.constant 2 : i32
    %112 = tpu.dynamic_rotate %99 by %c2_i32_74 dim 0 : vector<32x8xf32>, i32 -> vector<32x8xf32>
    %cst_75 = arith.constant 0.000000e+00 : f32
    %113 = vector.shape_cast %111 : vector<32x1xi1> to vector<32x1xi1>
    %114 = vector.broadcast %113 : vector<32x1xi1> to vector<32x8xi1>
    %115 = vector.broadcast %cst_75 : f32 to vector<32x8xf32>
    %116 = arith.select %114, %112, %115 : vector<32x8xi1>, vector<32x8xf32>
    %c1_76 = arith.constant 1 : index
    %c0_77 = arith.constant 0 : index
    %c0_78 = arith.constant 0 : index
    %117 = vector.load %arg10[%c1_76, %c0_77, %c0_78] : memref<3x8x8xf32, #tpu.memory_space<vmem>>, vector<1x8x8xf32>
    %118 = vector.shape_cast %117 : vector<1x8x8xf32> to vector<8x8xf32>
    %cst_79 = arith.constant dense<0.000000e+00> : vector<32x8xf32>
    %119 = tpu.matmul %116, %118, %cst_79 {dimension_numbers = #tpu.dot_dimension_numbers<[1], [0], [0], [1], [0, 0, 1, 1], [], []>} : vector<32x8xf32>, vector<8x8xf32>, vector<32x8xf32> -> vector<32x8xf32>
    %120 = arith.addf %109, %119 : vector<32x8xf32>
    %c2_80 = arith.constant 2 : index
    %c0_81 = arith.constant 0 : index
    %c0_82 = arith.constant 0 : index
    %121 = vector.load %arg10[%c2_80, %c0_81, %c0_82] : memref<3x8x8xf32, #tpu.memory_space<vmem>>, vector<1x8x8xf32>
    %122 = vector.shape_cast %121 : vector<1x8x8xf32> to vector<8x8xf32>
    %cst_83 = arith.constant dense<0.000000e+00> : vector<32x8xf32>
    %123 = tpu.matmul %99, %122, %cst_83 {dimension_numbers = #tpu.dot_dimension_numbers<[1], [0], [0], [1], [0, 0, 1, 1], [], []>} : vector<32x8xf32>, vector<8x8xf32>, vector<32x8xf32> -> vector<32x8xf32>
    %124 = arith.addf %120, %123 : vector<32x8xf32>
    %c0_84 = arith.constant 0 : index
    %c0_85 = arith.constant 0 : index
    %125 = vector.load %arg11[%c0_84, %c0_85] : memref<1x8xf32, #tpu.memory_space<vmem>>, vector<1x8xf32>
    %126 = vector.broadcast %125 : vector<1x8xf32> to vector<32x8xf32>
    %127 = arith.addf %124, %126 : vector<32x8xf32>
    %cst_86 = arith.constant 0.000000e+00 : f32
    %128 = vector.broadcast %cst_86 : f32 to vector<32x8xf32>
    %129 = arith.maximumf %127, %128 : vector<32x8xf32>
    %130 = arith.addf %129, %69 : vector<32x8xf32>
    %cst_87 = arith.constant 0.000000e+00 : f32
    %131 = vector.broadcast %cst_87 : f32 to vector<32x8xf32>
    %132 = arith.maximumf %130, %131 : vector<32x8xf32>
    %133 = tpu.iota {dimensions = array<i32: 1>} : vector<2x32xi32>
    %134 = tpu.iota {dimensions = array<i32: 0>} : vector<2x32xi32>
    %c16_i32 = arith.constant 16 : i32
    %135 = vector.broadcast %c16_i32 : i32 to vector<2x32xi32>
    %136 = arith.muli %134, %135 : vector<2x32xi32>
    %c15_i32 = arith.constant 15 : i32
    %137 = vector.broadcast %c15_i32 : i32 to vector<2x32xi32>
    %138 = arith.addi %136, %137 : vector<2x32xi32>
    %139 = arith.cmpi eq, %133, %138 : vector<2x32xi32>
    %140 = arith.extui %139 : vector<2x32xi1> to vector<2x32xi32>
    %141 = arith.sitofp %140 : vector<2x32xi32> to vector<2x32xf32>
    %cst_88 = arith.constant dense<0.000000e+00> : vector<2x8xf32>
    %142 = tpu.matmul %141, %132, %cst_88 {dimension_numbers = #tpu.dot_dimension_numbers<[1], [0], [0], [1], [0, 0, 1, 1], [], []>} : vector<2x32xf32>, vector<32x8xf32>, vector<2x8xf32> -> vector<2x8xf32>
    %c0_89 = arith.constant 0 : index
    %c0_90 = arith.constant 0 : index
    %143 = vector.load %arg12[%c0_89, %c0_90] : memref<8x1xf32, #tpu.memory_space<vmem>>, vector<8x1xf32>
    %cst_91 = arith.constant dense<0.000000e+00> : vector<2x1xf32>
    %144 = tpu.matmul %142, %143, %cst_91 {dimension_numbers = #tpu.dot_dimension_numbers<[1], [0], [0], [1], [0, 0, 1, 1], [], []>} : vector<2x8xf32>, vector<8x1xf32>, vector<2x1xf32> -> vector<2x1xf32>
    %c0_92 = arith.constant 0 : index
    %c0_93 = arith.constant 0 : index
    %145 = vector.load %arg13[%c0_92, %c0_93] : memref<1x1xf32, #tpu.memory_space<vmem>>, vector<1x1xf32>
    %146 = vector.broadcast %145 : vector<1x1xf32> to vector<2x1xf32>
    %147 = arith.addf %144, %146 : vector<2x1xf32>
    %c0_94 = arith.constant 0 : index
    %c0_95 = arith.constant 0 : index
    %148 = vector.load %arg14[%c0_94, %c0_95] : memref<2x1xf32, #tpu.memory_space<vmem>>, vector<2x1xf32>
    tpu.vector_store %arg14[%c0_94, %c0_95], %147 {strides = array<i32>} : memref<2x1xf32, #tpu.memory_space<vmem>>, vector<2x1xf32>,
    return
  }
}

</mosaic_0001>

<llo_original>
// kernel: tcn_forward.1
$region0: #{tcn_forward.1}
  #allocation0 [shape = 'u32[]', space=smem, size = 0x4, offset = 0x4, fixed_abs, tag = 'smem constant byte address 0x4 - core index']
  #allocation1 [shape = 'u32[144,128]{1,0:T(1,128)}', space=vmem, size = 0x12000, scoped, tag = 'internal scratch']
  #allocation2 [shape = 'f32[1,1]{1,0:T(1,128)S(1)}', space=vmem, size = 0x200, scoped, tag = 'scoped memory for tcn_forward.1']
  %s0 = inlined_call_operand.vmem [shape: f32[32,2], index: 0, kind: input, shape index: {}]
  %s1 = inlined_call_operand.vmem [shape: s32[32,1], index: 1, kind: input, shape index: {}]
  %s2 = inlined_call_operand.vmem [shape: f32[3,2,8], index: 2, kind: input, shape index: {}]
  %s3 = inlined_call_operand.vmem [shape: f32[1,8], index: 3, kind: input, shape index: {}]
  %s4 = inlined_call_operand.vmem [shape: f32[3,8,8], index: 4, kind: input, shape index: {}]
  %s5 = inlined_call_operand.vmem [shape: f32[1,8], index: 5, kind: input, shape index: {}]
  %s6 = inlined_call_operand.vmem [shape: f32[2,8], index: 6, kind: input, shape index: {}]
  %s7 = inlined_call_operand.vmem [shape: f32[1,8], index: 7, kind: input, shape index: {}]
  %s8 = inlined_call_operand.vmem [shape: f32[3,8,8], index: 8, kind: input, shape index: {}]
  %s9 = inlined_call_operand.vmem [shape: f32[1,8], index: 9, kind: input, shape index: {}]
  %s10 = inlined_call_operand.vmem [shape: f32[3,8,8], index: 10, kind: input, shape index: {}]
  %s11 = inlined_call_operand.vmem [shape: f32[1,8], index: 11, kind: input, shape index: {}]
  %s12 = inlined_call_operand.vmem [shape: f32[8,1], index: 12, kind: input, shape index: {}]
  %s13 = inlined_call_operand.<no memory space> [shape: f32[1,1], index: 13, kind: input, shape index: {}]
  %s14 = inlined_call_operand.vmem [shape: f32[2,1], index: 14, kind: output, shape index: {}]
  %s15 = sld [smem:[#allocation0]]
  $region66: #{tcn_forward.1} parent=0
    _
  %s17 = ssub.s32 1, %s15
  %s18 = scalar_select 0, %s17, %s15
  %v19 = vstv %s13
  %20 = vst [vmem:[#allocation2] sm:$0x1] %v19
  // Predicated region
  $region2: #{tcn_forward.1} parent=0 // pred_check
    _
  $region3: #{tcn_forward.1} parent=0 // pred_check_branch
    %22 = sbr.rel (0) target = $region5
  $region4: #{tcn_forward.1} parent=0 // pred_region
    _
  $region5: #{tcn_forward.1} parent=0 // pred_fallthru
    _
  // Predicated region
  $region6: #{tcn_forward.1} parent=0 // pred_check
    _
  $region7: #{tcn_forward.1} parent=0 // pred_check_branch
    %24 = sbr.rel (0) target = $region9
  $region8: #{tcn_forward.1} parent=0 // pred_region
    _
  $region9: #{tcn_forward.1} parent=0 // pred_fallthru
    _
  // Predicated region
  $region10: #{tcn_forward.1} parent=0 // pred_check
    _
  $region11: #{tcn_forward.1} parent=0 // pred_check_branch
    %26 = sbr.rel (0) target = $region13
  $region12: #{tcn_forward.1} parent=0 // pred_region
    _
  $region13: #{tcn_forward.1} parent=0 // pred_fallthru
    _
  // Predicated region
  $region14: #{tcn_forward.1} parent=0 // pred_check
    _
  $region15: #{tcn_forward.1} parent=0 // pred_check_branch
    %28 = sbr.rel (0) target = $region17
  $region16: #{tcn_forward.1} parent=0 // pred_region
    _
  $region17: #{tcn_forward.1} parent=0 // pred_fallthru
    _
  // Predicated region
  $region18: #{tcn_forward.1} parent=0 // pred_check
    _
  $region19: #{tcn_forward.1} parent=0 // pred_check_branch
    %30 = sbr.rel (0) target = $region21
  $region20: #{tcn_forward.1} parent=0 // pred_region
    _
  $region21: #{tcn_forward.1} parent=0 // pred_fallthru
    _
  // Predicated region
  $region22: #{tcn_forward.1} parent=0 // pred_check
    _
  $region23: #{tcn_forward.1} parent=0 // pred_check_branch
    %32 = sbr.rel (0) target = $region25
  $region24: #{tcn_forward.1} parent=0 // pred_region
    _
  $region25: #{tcn_forward.1} parent=0 // pred_fallthru
    _
  // Predicated region
  $region26: #{tcn_forward.1} parent=0 // pred_check
    _
  $region27: #{tcn_forward.1} parent=0 // pred_check_branch
    %34 = sbr.rel (0) target = $region29
  $region28: #{tcn_forward.1} parent=0 // pred_region
    _
  $region29: #{tcn_forward.1} parent=0 // pred_fallthru
    _
  // Predicated region
  $region30: #{tcn_forward.1} parent=0 // pred_check
    _
  $region31: #{tcn_forward.1} parent=0 // pred_check_branch
    %36 = sbr.rel (0) target = $region33
  $region32: #{tcn_forward.1} parent=0 // pred_region
    _
  $region33: #{tcn_forward.1} parent=0 // pred_fallthru
    _
  // Predicated region
  $region34: #{tcn_forward.1} parent=0 // pred_check
    _
  $region35: #{tcn_forward.1} parent=0 // pred_check_branch
    %38 = sbr.rel (0) target = $region37
  $region36: #{tcn_forward.1} parent=0 // pred_region
    _
  $region37: #{tcn_forward.1} parent=0 // pred_fallthru
    _
  // Predicated region
  $region38: #{tcn_forward.1} parent=0 // pred_check
    _
  $region39: #{tcn_forward.1} parent=0 // pred_check_branch
    %40 = sbr.rel (0) target = $region41
  $region40: #{tcn_forward.1} parent=0 // pred_region
    _
  $region41: #{tcn_forward.1} parent=0 // pred_fallthru
    _
  // Predicated region
  $region42: #{tcn_forward.1} parent=0 // pred_check
    _
  $region43: #{tcn_forward.1} parent=0 // pred_check_branch
    %42 = sbr.rel (0) target = $region45
  $region44: #{tcn_forward.1} parent=0 // pred_region
    _
  $region45: #{tcn_forward.1} parent=0 // pred_fallthru
    _
  // Predicated region
  $region46: #{tcn_forward.1} parent=0 // pred_check
    _
  $region47: #{tcn_forward.1} parent=0 // pred_check_branch
    %44 = sbr.rel (0) target = $region49
  $region48: #{tcn_forward.1} parent=0 // pred_region
    _
  $region49: #{tcn_forward.1} parent=0 // pred_fallthru
    _
  // Predicated region
  $region50: #{tcn_forward.1} parent=0 // pred_check
    _
  $region51: #{tcn_forward.1} parent=0 // pred_check_branch
    %46 = sbr.rel (0) target = $region53
  $region52: #{tcn_forward.1} parent=0 // pred_region
    _
  $region53: #{tcn_forward.1} parent=0 // pred_fallthru
    _
  // Predicated region
  $region54: #{tcn_forward.1} parent=0 // pred_check
    _
  $region55: #{tcn_forward.1} parent=0 // pred_check_branch
    %48 = sbr.rel (0) target = $region57
  $region56: #{tcn_forward.1} parent=0 // pred_region
    _
  $region57: #{tcn_forward.1} parent=0 // pred_fallthru
    _
  %v49 = vld [vmem:[%s1] sm:$0xff]
  %v50 = vld [vmem:[%s1 + $0x8] sm:$0xff]
  %v51 = vld [vmem:[%s1 + $0x10] sm:$0xff]
  %v52 = vld [vmem:[%s1 + $0x18] sm:$0xff]
  %v53 = vld [vmem:[%s0] sm:$0xff]
  %v54 = vld [vmem:[%s0 + $0x8] sm:$0xff]
  %v55 = vld [vmem:[%s0 + $0x10] sm:$0xff]
  %v56 = vld [vmem:[%s0 + $0x18] sm:$0xff]
  %v57 = vld [vmem:[%s6] sm:$0x3]
  %v58 = vld [vmem:[%s7] sm:$0x1]
  %v60 = vlaneseq
  %v61 = vshrl.u32 %v60, 7
  %v62 = vsub.s32 0, %v61
  %v63 = vrot.slane %v58, %v62
  %vm65 = vcmask 15360
  %v67 = vsel %vm65, %v53, 0
  %v70 = vsel %vm65, %v54, 0
  %v73 = vsel %vm65, %v55, 0
  %v76 = vsel %vm65, %v56, 0
  %vm78 = vcmask 1041408
  %v80 = vsel %vm78, %v57, 0
  %82 = vmatprep.subr.mxu0 0.0
  %83 = vmatpush1.msra.mxu0 %v80
  %84 = vmatprep.subr.mxu0 0.0
  %85 = vmatpush1.msra.mxu0 0.0
  %86 = vmatprep.subr.mxu0 0.0
  %87 = vmatpush1.msra.mxu0 0.0
  %88 = vmatprep.subr.mxu0 0.0
  %89 = vmatpush1.msra.mxu0 0.0
  %90 = vmatprep.subr.mxu0 0.0
  %91 = vmatpush1.msra.mxu0 0.0
  %92 = vmatprep.subr.mxu0 0.0
  %93 = vmatpush1.msra.mxu0 0.0
  %94 = vmatprep.subr.mxu0 0.0
  %95 = vmatpush1.msra.mxu0 0.0
  %96 = vmatprep.subr.mxu0 0.0
  %97 = vmatpush1.msra.mxu0 0.0
  %98 = vmatprep.subr.mxu0 0.0
  %99 = vmatpush1.msra.mxu0 0.0
  %100 = vmatprep.subr.mxu0 0.0
  %101 = vmatpush1.msra.mxu0 0.0
  %102 = vmatprep.subr.mxu0 0.0
  %103 = vmatpush1.msra.mxu0 0.0
  %104 = vmatprep.subr.mxu0 0.0
  %105 = vmatpush1.msra.mxu0 0.0
  %106 = vmatprep.subr.mxu0 0.0
  %107 = vmatpush1.msra.mxu0 0.0
  %108 = vmatprep.subr.mxu0 0.0
  %109 = vmatpush1.msra.mxu0 0.0
  %110 = vmatprep.subr.mxu0 0.0
  %111 = vmatpush1.msra.mxu0 0.0
  %112 = vmatprep.subr.mxu0 0.0
  %113 = vmatpush1.msra.mxu0 0.0
  %114 = vmatprep.subr.mxu0 0.0
  %115 = vmatpush1.msra.mxu0 0.0
  %116 = vmatprep.subr.mxu0 0.0
  %117 = vmatpush1.msra.mxu0 0.0
  %118 = vmatprep.subr.mxu0 0.0
  %119 = vmatpush1.msra.mxu0 0.0
  %120 = vmatprep.subr.mxu0 0.0
  %121 = vmatpush1.msra.mxu0 0.0
  %122 = vmatprep.subr.mxu0 0.0
  %123 = vmatpush1.msra.mxu0 0.0
  %124 = vmatprep.subr.mxu0 0.0
  %125 = vmatpush1.msra.mxu0 0.0
  %126 = vmatprep.subr.mxu0 0.0
  %127 = vmatpush1.msra.mxu0 0.0
  %128 = vmatprep.subr.mxu0 0.0
  %129 = vmatpush1.msra.mxu0 0.0
  %130 = vmatprep.subr.mxu0 0.0
  %131 = vmatpush1.msra.mxu0 0.0
  %132 = vmatprep.subr.mxu0 0.0
  %133 = vmatpush1.msra.mxu0 0.0
  %134 = vmatprep.subr.mxu0 0.0
  %135 = vmatpush1.msra.mxu0 0.0
  %136 = vmatprep.subr.mxu0 0.0
  %137 = vmatpush1.msra.mxu0 0.0
  %138 = vmatprep.subr.mxu0 0.0
  %139 = vmatpush1.msra.mxu0 0.0
  %140 = vmatprep.subr.mxu0 0.0
  %141 = vmatpush1.msra.mxu0 0.0
  %142 = vmatprep.subr.mxu0 0.0
  %143 = vmatpush1.msra.mxu0 0.0
  %144 = vmatprep.subr.mxu0 0.0
  %145 = vmatpush1.msra.mxu0 0.0
  %146 = vmatprep.mubr.f32.mxu0 0.0
  %147 = vmatmul.mubr.f32.gmra.mrb[0].mxu0 %v67
  %v148 = vpop.f32.mrb[0].mxu0
  %v149 = vadd.f32 %v63, %v148
  %v150 = vpop.f32.mrb[0].mxu0
  %151 = vmatprep.mubr.f32.mxu0 0.0
  %152 = vmatmul.mubr.f32.gmra.mrb[0].mxu0 %v70
  %v153 = vpop.f32.mrb[0].mxu0
  %v154 = vadd.f32 %v63, %v153
  %v155 = vpop.f32.mrb[0].mxu0
  %156 = vmatprep.mubr.f32.mxu0 0.0
  %157 = vmatmul.mubr.f32.gmra.mrb[0].mxu0 %v73
  %v158 = vpop.f32.mrb[0].mxu0
  %v159 = vadd.f32 %v63, %v158
  %v160 = vpop.f32.mrb[0].mxu0
  %161 = vmatprep.mubr.f32.mxu0 0.0
  %162 = vmatmul.mubr.f32.gmra.mrb[0].mxu0 %v76
  %v163 = vpop.f32.mrb[0].mxu0
  %v164 = vadd.f32 %v63, %v163
  %v165 = vpop.f32.mrb[0].mxu0
  %166 = vdwg.mxu0
  %vm167 = vcmp.ge.s32.totalorder %v49, 2
  %vm168 = vcmp.ge.s32.totalorder %v50, 2
  %vm169 = vcmp.ge.s32.totalorder %v51, 2
  %vm170 = vcmp.ge.s32.totalorder %v52, 2
  %v171 = vrot.slane %v53, 6
  %v172 = vrot.slane %v54, 6
  %v173 = vrot.slane %v55, 6
  %v174 = vrot.slane %v56, 6
  %v175 = vlaneseq
  %v176 = vshrl.u32 %v175, 7
  %vm177 = vcmp.lt.s32.totalorder %v176, 2
  %v178 = vsel %vm177, %v173, %v174
  %v179 = vsel %vm177, %v172, %v173
  %v180 = vsel %vm177, %v171, %v172
  %v181 = vsel %vm177, %v174, %v171
  %v182 = vsel %vm167, 1, 0
  %v183 = vsel %vm168, 1, 0
  %v184 = vsel %vm169, 1, 0
  %v185 = vsel %vm170, 1, 0
  %186 = vset.pattern.permute.xlu0 0
  %187 = vperm.xlu0 %186, %v182
  %v188 = vpop.permute.xlu0 %187
  %189 = vset.pattern.permute.xlu0 0
  %190 = vperm.xlu0 %189, %v183
  %v191 = vpop.permute.xlu0 %190
  %192 = vset.pattern.permute.xlu0 0
  %193 = vperm.xlu0 %192, %v184
  %v194 = vpop.permute.xlu0 %193
  %195 = vset.pattern.permute.xlu0 0
  %196 = vperm.xlu0 %195, %v185
  %v197 = vpop.permute.xlu0 %196
  %vm198 = vcmp.eq.s32.totalorder %v188, 1
  %vm199 = vcmp.eq.s32.totalorder %v191, 1
  %vm200 = vcmp.eq.s32.totalorder %v194, 1
  %vm201 = vcmp.eq.s32.totalorder %v197, 1
  %v202 = vsel %vm198, %v181, 0.0
  %v203 = vsel %vm199, %v180, 0.0
  %v204 = vsel %vm200, %v179, 0.0
  %v205 = vsel %vm201, %v178, 0.0
  %v206 = vld [vmem:[%s2] sm:$0x3]
  %vm207 = vcmp.ge.s32.totalorder %v49, 1
  %vm208 = vcmp.ge.s32.totalorder %v50, 1
  %vm209 = vcmp.ge.s32.totalorder %v51, 1
  %vm210 = vcmp.ge.s32.totalorder %v52, 1
  %v211 = vrot.slane %v53, 7
  %v212 = vrot.slane %v54, 7
  %v213 = vrot.slane %v55, 7
  %v214 = vrot.slane %v56, 7
  %vm215 = vcmp.lt.s32.totalorder %v176, 1
  %v216 = vsel %vm215, %v213, %v214
  %v217 = vsel %vm215, %v212, %v213
  %v218 = vsel %vm215, %v211, %v212
  %v219 = vsel %vm215, %v214, %v211
  %v220 = vsel %vm207, 1, 0
  %v221 = vsel %vm208, 1, 0
  %v222 = vsel %vm209, 1, 0
  %v223 = vsel %vm210, 1, 0
  %224 = vset.pattern.permute.xlu0 0
  %225 = vperm.xlu0 %224, %v220
  %v226 = vpop.permute.xlu0 %225
  %227 = vset.pattern.permute.xlu0 0
  %228 = vperm.xlu0 %227, %v221
  %v229 = vpop.permute.xlu0 %228
  %230 = vset.pattern.permute.xlu0 0
  %231 = vperm.xlu0 %230, %v222
  %v232 = vpop.permute.xlu0 %231
  %233 = vset.pattern.permute.xlu0 0
  %234 = vperm.xlu0 %233, %v223
  %v235 = vpop.permute.xlu0 %234
  %vm236 = vcmp.eq.s32.totalorder %v226, 1
  %vm237 = vcmp.eq.s32.totalorder %v229, 1
  %vm238 = vcmp.eq.s32.totalorder %v232, 1
  %vm239 = vcmp.eq.s32.totalorder %v235, 1
  %v240 = vsel %vm236, %v219, 0.0
  %v241 = vsel %vm237, %v218, 0.0
  %v242 = vsel %vm238, %v217, 0.0
  %v243 = vsel %vm239, %v216, 0.0
  %s244 = scalar_lea.vmem %s2, 2
  %v245 = vld [vmem:[%s244] sm:$0x3]
  %v247 = vsel %vm65, %v240, 0
  %v250 = vsel %vm65, %v241, 0
  %v253 = vsel %vm65, %v242, 0
  %v256 = vsel %vm65, %v243, 0
  %v259 = vsel %vm78, %v245, 0
  %261 = vmatprep.subr.mxu0 0.0
  %262 = vmatpush1.msra.mxu0 %v259
  %263 = vmatprep.subr.mxu0 0.0
  %264 = vmatpush1.msra.mxu0 0.0
  %265 = vmatprep.subr.mxu0 0.0
  %266 = vmatpush1.msra.mxu0 0.0
  %267 = vmatprep.subr.mxu0 0.0
  %268 = vmatpush1.msra.mxu0 0.0
  %269 = vmatprep.subr.mxu0 0.0
  %270 = vmatpush1.msra.mxu0 0.0
  %271 = vmatprep.subr.mxu0 0.0
  %272 = vmatpush1.msra.mxu0 0.0
  %273 = vmatprep.subr.mxu0 0.0
  %274 = vmatpush1.msra.mxu0 0.0
  %275 = vmatprep.subr.mxu0 0.0
  %276 = vmatpush1.msra.mxu0 0.0
  %277 = vmatprep.subr.mxu0 0.0
  %278 = vmatpush1.msra.mxu0 0.0
  %279 = vmatprep.subr.mxu0 0.0
  %280 = vmatpush1.msra.mxu0 0.0
  %281 = vmatprep.subr.mxu0 0.0
  %282 = vmatpush1.msra.mxu0 0.0
  %283 = vmatprep.subr.mxu0 0.0
  %284 = vmatpush1.msra.mxu0 0.0
  %285 = vmatprep.subr.mxu0 0.0
  %286 = vmatpush1.msra.mxu0 0.0
  %287 = vmatprep.subr.mxu0 0.0
  %288 = vmatpush1.msra.mxu0 0.0
  %289 = vmatprep.subr.mxu0 0.0
  %290 = vmatpush1.msra.mxu0 0.0
  %291 = vmatprep.subr.mxu0 0.0
  %292 = vmatpush1.msra.mxu0 0.0
  %293 = vmatprep.subr.mxu0 0.0
  %294 = vmatpush1.msra.mxu0 0.0
  %295 = vmatprep.subr.mxu0 0.0
  %296 = vmatpush1.msra.mxu0 0.0
  %297 = vmatprep.subr.mxu0 0.0
  %298 = vmatpush1.msra.mxu0 0.0
  %299 = vmatprep.subr.mxu0 0.0
  %300 = vmatpush1.msra.mxu0 0.0
  %301 = vmatprep.subr.mxu0 0.0
  %302 = vmatpush1.msra.mxu0 0.0
  %303 = vmatprep.subr.mxu0 0.0
  %304 = vmatpush1.msra.mxu0 0.0
  %305 = vmatprep.subr.mxu0 0.0
  %306 = vmatpush1.msra.mxu0 0.0
  %307 = vmatprep.subr.mxu0 0.0
  %308 = vmatpush1.msra.mxu0 0.0
  %309 = vmatprep.subr.mxu0 0.0
  %310 = vmatpush1.msra.mxu0 0.0
  %311 = vmatprep.subr.mxu0 0.0
  %312 = vmatpush1.msra.mxu0 0.0
  %313 = vmatprep.subr.mxu0 0.0
  %314 = vmatpush1.msra.mxu0 0.0
  %315 = vmatprep.subr.mxu0 0.0
  %316 = vmatpush1.msra.mxu0 0.0
  %317 = vmatprep.subr.mxu0 0.0
  %318 = vmatpush1.msra.mxu0 0.0
  %319 = vmatprep.subr.mxu0 0.0
  %320 = vmatpush1.msra.mxu0 0.0
  %321 = vmatprep.subr.mxu0 0.0
  %322 = vmatpush1.msra.mxu0 0.0
  %323 = vmatprep.subr.mxu0 0.0
  %324 = vmatpush1.msra.mxu0 0.0
  %325 = vmatprep.mubr.f32.mxu0 0.0
  %326 = vmatmul.mubr.f32.gmra.mrb[0].mxu0 %v247
  %v327 = vpop.f32.mrb[0].mxu0
  %v328 = vadd.f32 0.0, %v327
  %v329 = vpop.f32.mrb[0].mxu0
  %330 = vmatprep.mubr.f32.mxu0 0.0
  %331 = vmatmul.mubr.f32.gmra.mrb[0].mxu0 %v250
  %v332 = vpop.f32.mrb[0].mxu0
  %v333 = vadd.f32 0.0, %v332
  %v334 = vpop.f32.mrb[0].mxu0
  %335 = vmatprep.mubr.f32.mxu0 0.0
  %336 = vmatmul.mubr.f32.gmra.mrb[0].mxu0 %v253
  %v337 = vpop.f32.mrb[0].mxu0
  %v338 = vadd.f32 0.0, %v337
  %v339 = vpop.f32.mrb[0].mxu0
  %340 = vmatprep.mubr.f32.mxu0 0.0
  %341 = vmatmul.mubr.f32.gmra.mrb[0].mxu0 %v256
  %v342 = vpop.f32.mrb[0].mxu0
  %v343 = vadd.f32 0.0, %v342
  %v344 = vpop.f32.mrb[0].mxu0
  %345 = vdwg.mxu0
  %v347 = vsel %vm65, %v202, 0
  %v350 = vsel %vm65, %v203, 0
  %v353 = vsel %vm65, %v204, 0
  %v356 = vsel %vm65, %v205, 0
  %v359 = vsel %vm78, %v206, 0
  %361 = vmatprep.subr.mxu0 0.0
  %362 = vmatpush1.msra.mxu0 %v359
  %363 = vmatprep.subr.mxu0 0.0
  %364 = vmatpush1.msra.mxu0 0.0
  %365 = vmatprep.subr.mxu0 0.0
  %366 = vmatpush1.msra.mxu0 0.0
  %367 = vmatprep.subr.mxu0 0.0
  %368 = vmatpush1.msra.mxu0 0.0
  %369 = vmatprep.subr.mxu0 0.0
  %370 = vmatpush1.msra.mxu0 0.0
  %371 = vmatprep.subr.mxu0 0.0
  %372 = vmatpush1.msra.mxu0 0.0
  %373 = vmatprep.subr.mxu0 0.0
  %374 = vmatpush1.msra.mxu0 0.0
  %375 = vmatprep.subr.mxu0 0.0
  %376 = vmatpush1.msra.mxu0 0.0
  %377 = vmatprep.subr.mxu0 0.0
  %378 = vmatpush1.msra.mxu0 0.0
  %379 = vmatprep.subr.mxu0 0.0
  %380 = vmatpush1.msra.mxu0 0.0
  %381 = vmatprep.subr.mxu0 0.0
  %382 = vmatpush1.msra.mxu0 0.0
  %383 = vmatprep.subr.mxu0 0.0
  %384 = vmatpush1.msra.mxu0 0.0
  %385 = vmatprep.subr.mxu0 0.0
  %386 = vmatpush1.msra.mxu0 0.0
  %387 = vmatprep.subr.mxu0 0.0
  %388 = vmatpush1.msra.mxu0 0.0
  %389 = vmatprep.subr.mxu0 0.0
  %390 = vmatpush1.msra.mxu0 0.0
  %391 = vmatprep.subr.mxu0 0.0
  %392 = vmatpush1.msra.mxu0 0.0
  %393 = vmatprep.subr.mxu0 0.0
  %394 = vmatpush1.msra.mxu0 0.0
  %395 = vmatprep.subr.mxu0 0.0
  %396 = vmatpush1.msra.mxu0 0.0
  %397 = vmatprep.subr.mxu0 0.0
  %398 = vmatpush1.msra.mxu0 0.0
  %399 = vmatprep.subr.mxu0 0.0
  %400 = vmatpush1.msra.mxu0 0.0
  %401 = vmatprep.subr.mxu0 0.0
  %402 = vmatpush1.msra.mxu0 0.0
  %403 = vmatprep.subr.mxu0 0.0
  %404 = vmatpush1.msra.mxu0 0.0
  %405 = vmatprep.subr.mxu0 0.0
  %406 = vmatpush1.msra.mxu0 0.0
  %407 = vmatprep.subr.mxu0 0.0
  %408 = vmatpush1.msra.mxu0 0.0
  %409 = vmatprep.subr.mxu0 0.0
  %410 = vmatpush1.msra.mxu0 0.0
  %411 = vmatprep.subr.mxu0 0.0
  %412 = vmatpush1.msra.mxu0 0.0
  %413 = vmatprep.subr.mxu0 0.0
  %414 = vmatpush1.msra.mxu0 0.0
  %415 = vmatprep.subr.mxu0 0.0
  %416 = vmatpush1.msra.mxu0 0.0
  %417 = vmatprep.subr.mxu0 0.0
  %418 = vmatpush1.msra.mxu0 0.0
  %419 = vmatprep.subr.mxu0 0.0
  %420 = vmatpush1.msra.mxu0 0.0
  %421 = vmatprep.subr.mxu0 0.0
  %422 = vmatpush1.msra.mxu0 0.0
  %423 = vmatprep.subr.mxu0 0.0
  %424 = vmatpush1.msra.mxu0 0.0
  %425 = vmatprep.mubr.f32.mxu0 0.0
  %426 = vmatmul.mubr.f32.gmra.mrb[0].mxu0 %v347
  %v427 = vpop.f32.mrb[0].mxu0
  %v428 = vadd.f32 %v328, %v427
  %v429 = vpop.f32.mrb[0].mxu0
  %430 = vmatprep.mubr.f32.mxu0 0.0
  %431 = vmatmul.mubr.f32.gmra.mrb[0].mxu0 %v350
  %v432 = vpop.f32.mrb[0].mxu0
  %v433 = vadd.f32 %v333, %v432
  %v434 = vpop.f32.mrb[0].mxu0
  %435 = vmatprep.mubr.f32.mxu0 0.0
  %436 = vmatmul.mubr.f32.gmra.mrb[0].mxu0 %v353
  %v437 = vpop.f32.mrb[0].mxu0
  %v438 = vadd.f32 %v338, %v437
  %v439 = vpop.f32.mrb[0].mxu0
  %440 = vmatprep.mubr.f32.mxu0 0.0
  %441 = vmatmul.mubr.f32.gmra.mrb[0].mxu0 %v356
  %v442 = vpop.f32.mrb[0].mxu0
  %v443 = vadd.f32 %v343, %v442
  %v444 = vpop.f32.mrb[0].mxu0
  %445 = vdwg.mxu0
  %s446 = scalar_lea.vmem %s2, 4
  %v447 = vld [vmem:[%s446] sm:$0x3]
  %v449 = vsel %vm78, %v447, 0
  %451 = vmatprep.subr.mxu0 0.0
  %452 = vmatpush1.msra.mxu0 %v449
  %453 = vmatprep.subr.mxu0 0.0
  %454 = vmatpush1.msra.mxu0 0.0
  %455 = vmatprep.subr.mxu0 0.0
  %456 = vmatpush1.msra.mxu0 0.0
  %457 = vmatprep.subr.mxu0 0.0
  %458 = vmatpush1.msra.mxu0 0.0
  %459 = vmatprep.subr.mxu0 0.0
  %460 = vmatpush1.msra.mxu0 0.0
  %461 = vmatprep.subr.mxu0 0.0
  %462 = vmatpush1.msra.mxu0 0.0
  %463 = vmatprep.subr.mxu0 0.0
  %464 = vmatpush1.msra.mxu0 0.0
  %465 = vmatprep.subr.mxu0 0.0
  %466 = vmatpush1.msra.mxu0 0.0
  %467 = vmatprep.subr.mxu0 0.0
  %468 = vmatpush1.msra.mxu0 0.0
  %469 = vmatprep.subr.mxu0 0.0
  %470 = vmatpush1.msra.mxu0 0.0
  %471 = vmatprep.subr.mxu0 0.0
  %472 = vmatpush1.msra.mxu0 0.0
  %473 = vmatprep.subr.mxu0 0.0
  %474 = vmatpush1.msra.mxu0 0.0
  %475 = vmatprep.subr.mxu0 0.0
  %476 = vmatpush1.msra.mxu0 0.0
  %477 = vmatprep.subr.mxu0 0.0
  %478 = vmatpush1.msra.mxu0 0.0
  %479 = vmatprep.subr.mxu0 0.0
  %480 = vmatpush1.msra.mxu0 0.0
  %481 = vmatprep.subr.mxu0 0.0
  %482 = vmatpush1.msra.mxu0 0.0
  %483 = vmatprep.subr.mxu0 0.0
  %484 = vmatpush1.msra.mxu0 0.0
  %485 = vmatprep.subr.mxu0 0.0
  %486 = vmatpush1.msra.mxu0 0.0
  %487 = vmatprep.subr.mxu0 0.0
  %488 = vmatpush1.msra.mxu0 0.0
  %489 = vmatprep.subr.mxu0 0.0
  %490 = vmatpush1.msra.mxu0 0.0
  %491 = vmatprep.subr.mxu0 0.0
  %492 = vmatpush1.msra.mxu0 0.0
  %493 = vmatprep.subr.mxu0 0.0
  %494 = vmatpush1.msra.mxu0 0.0
  %495 = vmatprep.subr.mxu0 0.0
  %496 = vmatpush1.msra.mxu0 0.0
  %497 = vmatprep.subr.mxu0 0.0
  %498 = vmatpush1.msra.mxu0 0.0
  %499 = vmatprep.subr.mxu0 0.0
  %500 = vmatpush1.msra.mxu0 0.0
  %501 = vmatprep.subr.mxu0 0.0
  %502 = vmatpush1.msra.mxu0 0.0
  %503 = vmatprep.subr.mxu0 0.0
  %504 = vmatpush1.msra.mxu0 0.0
  %505 = vmatprep.subr.mxu0 0.0
  %506 = vmatpush1.msra.mxu0 0.0
  %507 = vmatprep.subr.mxu0 0.0
  %508 = vmatpush1.msra.mxu0 0.0
  %509 = vmatprep.subr.mxu0 0.0
  %510 = vmatpush1.msra.mxu0 0.0
  %511 = vmatprep.subr.mxu0 0.0
  %512 = vmatpush1.msra.mxu0 0.0
  %513 = vmatprep.subr.mxu0 0.0
  %514 = vmatpush1.msra.mxu0 0.0
  %515 = vmatprep.mubr.f32.mxu0 0.0
  %516 = vmatmul.mubr.f32.gmra.mrb[0].mxu0 %v67
  %v517 = vpop.f32.mrb[0].mxu0
  %v518 = vadd.f32 0.0, %v517
  %v519 = vpop.f32.mrb[0].mxu0
  %520 = vmatprep.mubr.f32.mxu0 0.0
  %521 = vmatmul.mubr.f32.gmra.mrb[0].mxu0 %v70
  %v522 = vpop.f32.mrb[0].mxu0
  %v523 = vadd.f32 0.0, %v522
  %v524 = vpop.f32.mrb[0].mxu0
  %525 = vmatprep.mubr.f32.mxu0 0.0
  %526 = vmatmul.mubr.f32.gmra.mrb[0].mxu0 %v73
  %v527 = vpop.f32.mrb[0].mxu0
  %v528 = vadd.f32 0.0, %v527
  %v529 = vpop.f32.mrb[0].mxu0
  %530 = vmatprep.mubr.f32.mxu0 0.0
  %531 = vmatmul.mubr.f32.gmra.mrb[0].mxu0 %v76
  %v532 = vpop.f32.mrb[0].mxu0
  %v533 = vadd.f32 0.0, %v532
  %v534 = vpop.f32.mrb[0].mxu0
  %535 = vdwg.mxu0
  %v536 = vadd.f32 %v428, %v518
  %v537 = vadd.f32 %v433, %v523
  %v538 = vadd.f32 %v438, %v528
  %v539 = vadd.f32 %v443, %v533
  %v540 = vld [vmem:[%s3] sm:$0x1]
  %v542 = vlaneseq
  %v543 = vshrl.u32 %v542, 7
  %v544 = vsub.s32 0, %v543
  %v545 = vrot.slane %v540, %v544
  %v547 = vadd.f32 %v536, %v545
  %v548 = vadd.f32 %v537, %v545
  %v549 = vadd.f32 %v538, %v545
  %v550 = vadd.f32 %v539, %v545
  %v551 = vmax.f32 %v547, 0.0
  %v552 = vmax.f32 %v548, 0.0
  %v553 = vmax.f32 %v549, 0.0
  %v554 = vmax.f32 %v550, 0.0
  %v555 = vrot.slane %v551, 6
  %v556 = vrot.slane %v552, 6
  %v557 = vrot.slane %v553, 6
  %v558 = vrot.slane %v554, 6
  %v559 = vsel %vm177, %v557, %v558
  %v560 = vsel %vm177, %v556, %v557
  %v561 = vsel %vm177, %v555, %v556
  %v562 = vsel %vm177, %v558, %v555
  %v563 = vsel %vm198, %v562, 0.0
  %v564 = vsel %vm199, %v561, 0.0
  %v565 = vsel %vm200, %v560, 0.0
  %v566 = vsel %vm201, %v559, 0.0
  %v567 = vld [vmem:[%s4] sm:$0xff]
  %v568 = vrot.slane %v551, 7
  %v569 = vrot.slane %v552, 7
  %v570 = vrot.slane %v553, 7
  %v571 = vrot.slane %v554, 7
  %v572 = vsel %vm215, %v570, %v571
  %v573 = vsel %vm215, %v569, %v570
  %v574 = vsel %vm215, %v568, %v569
  %v575 = vsel %vm215, %v571, %v568
  %v576 = vsel %vm236, %v575, 0.0
  %v577 = vsel %vm237, %v574, 0.0
  %v578 = vsel %vm238, %v573, 0.0
  %v579 = vsel %vm239, %v572, 0.0
  %s580 = scalar_lea.vmem %s4, 8
  %v581 = vld [vmem:[%s580] sm:$0xff]
  %vm582 = vcmask 64512
  %v584 = vsel %vm582, %v576, 0
  %v587 = vsel %vm582, %v577, 0
  %v590 = vsel %vm582, %v578, 0
  %v593 = vsel %vm582, %v579, 0
  %595 = vmatprep.subr.mxu0 0.0
  %596 = vmatpush1.msra.mxu0 %v581
  %597 = vmatprep.subr.mxu0 0.0
  %598 = vmatpush1.msra.mxu0 0.0
  %599 = vmatprep.subr.mxu0 0.0
  %600 = vmatpush1.msra.mxu0 0.0
  %601 = vmatprep.subr.mxu0 0.0
  %602 = vmatpush1.msra.mxu0 0.0
  %603 = vmatprep.subr.mxu0 0.0
  %604 = vmatpush1.msra.mxu0 0.0
  %605 = vmatprep.subr.mxu0 0.0
  %606 = vmatpush1.msra.mxu0 0.0
  %607 = vmatprep.subr.mxu0 0.0
  %608 = vmatpush1.msra.mxu0 0.0
  %609 = vmatprep.subr.mxu0 0.0
  %610 = vmatpush1.msra.mxu0 0.0
  %611 = vmatprep.subr.mxu0 0.0
  %612 = vmatpush1.msra.mxu0 0.0
  %613 = vmatprep.subr.mxu0 0.0
  %614 = vmatpush1.msra.mxu0 0.0
  %615 = vmatprep.subr.mxu0 0.0
  %616 = vmatpush1.msra.mxu0 0.0
  %617 = vmatprep.subr.mxu0 0.0
  %618 = vmatpush1.msra.mxu0 0.0
  %619 = vmatprep.subr.mxu0 0.0
  %620 = vmatpush1.msra.mxu0 0.0
  %621 = vmatprep.subr.mxu0 0.0
  %622 = vmatpush1.msra.mxu0 0.0
  %623 = vmatprep.subr.mxu0 0.0
  %624 = vmatpush1.msra.mxu0 0.0
  %625 = vmatprep.subr.mxu0 0.0
  %626 = vmatpush1.msra.mxu0 0.0
  %627 = vmatprep.subr.mxu0 0.0
  %628 = vmatpush1.msra.mxu0 0.0
  %629 = vmatprep.subr.mxu0 0.0
  %630 = vmatpush1.msra.mxu0 0.0
  %631 = vmatprep.subr.mxu0 0.0
  %632 = vmatpush1.msra.mxu0 0.0
  %633 = vmatprep.subr.mxu0 0.0
  %634 = vmatpush1.msra.mxu0 0.0
  %635 = vmatprep.subr.mxu0 0.0
  %636 = vmatpush1.msra.mxu0 0.0
  %637 = vmatprep.subr.mxu0 0.0
  %638 = vmatpush1.msra.mxu0 0.0
  %639 = vmatprep.subr.mxu0 0.0
  %640 = vmatpush1.msra.mxu0 0.0
  %641 = vmatprep.subr.mxu0 0.0
  %642 = vmatpush1.msra.mxu0 0.0
  %643 = vmatprep.subr.mxu0 0.0
  %644 = vmatpush1.msra.mxu0 0.0
  %645 = vmatprep.subr.mxu0 0.0
  %646 = vmatpush1.msra.mxu0 0.0
  %647 = vmatprep.subr.mxu0 0.0
  %648 = vmatpush1.msra.mxu0 0.0
  %649 = vmatprep.subr.mxu0 0.0
  %650 = vmatpush1.msra.mxu0 0.0
  %651 = vmatprep.subr.mxu0 0.0
  %652 = vmatpush1.msra.mxu0 0.0
  %653 = vmatprep.subr.mxu0 0.0
  %654 = vmatpush1.msra.mxu0 0.0
  %655 = vmatprep.subr.mxu0 0.0
  %656 = vmatpush1.msra.mxu0 0.0
  %657 = vmatprep.subr.mxu0 0.0
  %658 = vmatpush1.msra.mxu0 0.0
  %659 = vmatprep.mubr.f32.mxu0 0.0
  %660 = vmatmul.mubr.f32.gmra.mrb[0].mxu0 %v584
  %v661 = vpop.f32.mrb[0].mxu0
  %v662 = vadd.f32 0.0, %v661
  %v663 = vpop.f32.mrb[0].mxu0
  %664 = vmatprep.mubr.f32.mxu0 0.0
  %665 = vmatmul.mubr.f32.gmra.mrb[0].mxu0 %v587
  %v666 = vpop.f32.mrb[0].mxu0
  %v667 = vadd.f32 0.0, %v666
  %v668 = vpop.f32.mrb[0].mxu0
  %669 = vmatprep.mubr.f32.mxu0 0.0
  %670 = vmatmul.mubr.f32.gmra.mrb[0].mxu0 %v590
  %v671 = vpop.f32.mrb[0].mxu0
  %v672 = vadd.f32 0.0, %v671
  %v673 = vpop.f32.mrb[0].mxu0
  %674 = vmatprep.mubr.f32.mxu0 0.0
  %675 = vmatmul.mubr.f32.gmra.mrb[0].mxu0 %v593
  %v676 = vpop.f32.mrb[0].mxu0
  %v677 = vadd.f32 0.0, %v676
  %v678 = vpop.f32.mrb[0].mxu0
  %679 = vdwg.mxu0
  %v681 = vsel %vm582, %v563, 0
  %v684 = vsel %vm582, %v564, 0
  %v687 = vsel %vm582, %v565, 0
  %v690 = vsel %vm582, %v566, 0
  %692 = vmatprep.subr.mxu0 0.0
  %693 = vmatpush1.msra.mxu0 %v567
  %694 = vmatprep.subr.mxu0 0.0
  %695 = vmatpush1.msra.mxu0 0.0
  %696 = vmatprep.subr.mxu0 0.0
  %697 = vmatpush1.msra.mxu0 0.0
  %698 = vmatprep.subr.mxu0 0.0
  %699 = vmatpush1.msra.mxu0 0.0
  %700 = vmatprep.subr.mxu0 0.0
  %701 = vmatpush1.msra.mxu0 0.0
  %702 = vmatprep.subr.mxu0 0.0
  %703 = vmatpush1.msra.mxu0 0.0
  %704 = vmatprep.subr.mxu0 0.0
  %705 = vmatpush1.msra.mxu0 0.0
  %706 = vmatprep.subr.mxu0 0.0
  %707 = vmatpush1.msra.mxu0 0.0
  %708 = vmatprep.subr.mxu0 0.0
  %709 = vmatpush1.msra.mxu0 0.0
  %710 = vmatprep.subr.mxu0 0.0
  %711 = vmatpush1.msra.mxu0 0.0
  %712 = vmatprep.subr.mxu0 0.0
  %713 = vmatpush1.msra.mxu0 0.0
  %714 = vmatprep.subr.mxu0 0.0
  %715 = vmatpush1.msra.mxu0 0.0
  %716 = vmatprep.subr.mxu0 0.0
  %717 = vmatpush1.msra.mxu0 0.0
  %718 = vmatprep.subr.mxu0 0.0
  %719 = vmatpush1.msra.mxu0 0.0
  %720 = vmatprep.subr.mxu0 0.0
  %721 = vmatpush1.msra.mxu0 0.0
  %722 = vmatprep.subr.mxu0 0.0
  %723 = vmatpush1.msra.mxu0 0.0
  %724 = vmatprep.subr.mxu0 0.0
  %725 = vmatpush1.msra.mxu0 0.0
  %726 = vmatprep.subr.mxu0 0.0
  %727 = vmatpush1.msra.mxu0 0.0
  %728 = vmatprep.subr.mxu0 0.0
  %729 = vmatpush1.msra.mxu0 0.0
  %730 = vmatprep.subr.mxu0 0.0
  %731 = vmatpush1.msra.mxu0 0.0
  %732 = vmatprep.subr.mxu0 0.0
  %733 = vmatpush1.msra.mxu0 0.0
  %734 = vmatprep.subr.mxu0 0.0
  %735 = vmatpush1.msra.mxu0 0.0
  %736 = vmatprep.subr.mxu0 0.0
  %737 = vmatpush1.msra.mxu0 0.0
  %738 = vmatprep.subr.mxu0 0.0
  %739 = vmatpush1.msra.mxu0 0.0
  %740 = vmatprep.subr.mxu0 0.0
  %741 = vmatpush1.msra.mxu0 0.0
  %742 = vmatprep.subr.mxu0 0.0
  %743 = vmatpush1.msra.mxu0 0.0
  %744 = vmatprep.subr.mxu0 0.0
  %745 = vmatpush1.msra.mxu0 0.0
  %746 = vmatprep.subr.mxu0 0.0
  %747 = vmatpush1.msra.mxu0 0.0
  %748 = vmatprep.subr.mxu0 0.0
  %749 = vmatpush1.msra.mxu0 0.0
  %750 = vmatprep.subr.mxu0 0.0
  %751 = vmatpush1.msra.mxu0 0.0
  %752 = vmatprep.subr.mxu0 0.0
  %753 = vmatpush1.msra.mxu0 0.0
  %754 = vmatprep.subr.mxu0 0.0
  %755 = vmatpush1.msra.mxu0 0.0
  %756 = vmatprep.mubr.f32.mxu0 0.0
  %757 = vmatmul.mubr.f32.gmra.mrb[0].mxu0 %v681
  %v758 = vpop.f32.mrb[0].mxu0
  %v759 = vadd.f32 %v662, %v758
  %v760 = vpop.f32.mrb[0].mxu0
  %761 = vmatprep.mubr.f32.mxu0 0.0
  %762 = vmatmul.mubr.f32.gmra.mrb[0].mxu0 %v684
  %v763 = vpop.f32.mrb[0].mxu0
  %v764 = vadd.f32 %v667, %v763
  %v765 = vpop.f32.mrb[0].mxu0
  %766 = vmatprep.mubr.f32.mxu0 0.0
  %767 = vmatmul.mubr.f32.gmra.mrb[0].mxu0 %v687
  %v768 = vpop.f32.mrb[0].mxu0
  %v769 = vadd.f32 %v672, %v768
  %v770 = vpop.f32.mrb[0].mxu0
  %771 = vmatprep.mubr.f32.mxu0 0.0
  %772 = vmatmul.mubr.f32.gmra.mrb[0].mxu0 %v690
  %v773 = vpop.f32.mrb[0].mxu0
  %v774 = vadd.f32 %v677, %v773
  %v775 = vpop.f32.mrb[0].mxu0
  %776 = vdwg.mxu0
  %s777 = scalar_lea.vmem %s4, 16
  %v778 = vld [vmem:[%s777] sm:$0xff]
  %v780 = vsel %vm582, %v551, 0
  %v783 = vsel %vm582, %v552, 0
  %v786 = vsel %vm582, %v553, 0
  %v789 = vsel %vm582, %v554, 0
  %791 = vmatprep.subr.mxu0 0.0
  %792 = vmatpush1.msra.mxu0 %v778
  %793 = vmatprep.subr.mxu0 0.0
  %794 = vmatpush1.msra.mxu0 0.0
  %795 = vmatprep.subr.mxu0 0.0
  %796 = vmatpush1.msra.mxu0 0.0
  %797 = vmatprep.subr.mxu0 0.0
  %798 = vmatpush1.msra.mxu0 0.0
  %799 = vmatprep.subr.mxu0 0.0
  %800 = vmatpush1.msra.mxu0 0.0
  %801 = vmatprep.subr.mxu0 0.0
  %802 = vmatpush1.msra.mxu0 0.0
  %803 = vmatprep.subr.mxu0 0.0
  %804 = vmatpush1.msra.mxu0 0.0
  %805 = vmatprep.subr.mxu0 0.0
  %806 = vmatpush1.msra.mxu0 0.0
  %807 = vmatprep.subr.mxu0 0.0
  %808 = vmatpush1.msra.mxu0 0.0
  %809 = vmatprep.subr.mxu0 0.0
  %810 = vmatpush1.msra.mxu0 0.0
  %811 = vmatprep.subr.mxu0 0.0
  %812 = vmatpush1.msra.mxu0 0.0
  %813 = vmatprep.subr.mxu0 0.0
  %814 = vmatpush1.msra.mxu0 0.0
  %815 = vmatprep.subr.mxu0 0.0
  %816 = vmatpush1.msra.mxu0 0.0
  %817 = vmatprep.subr.mxu0 0.0
  %818 = vmatpush1.msra.mxu0 0.0
  %819 = vmatprep.subr.mxu0 0.0
  %820 = vmatpush1.msra.mxu0 0.0
  %821 = vmatprep.subr.mxu0 0.0
  %822 = vmatpush1.msra.mxu0 0.0
  %823 = vmatprep.subr.mxu0 0.0
  %824 = vmatpush1.msra.mxu0 0.0
  %825 = vmatprep.subr.mxu0 0.0
  %826 = vmatpush1.msra.mxu0 0.0
  %827 = vmatprep.subr.mxu0 0.0
  %828 = vmatpush1.msra.mxu0 0.0
  %829 = vmatprep.subr.mxu0 0.0
  %830 = vmatpush1.msra.mxu0 0.0
  %831 = vmatprep.subr.mxu0 0.0
  %832 = vmatpush1.msra.mxu0 0.0
  %833 = vmatprep.subr.mxu0 0.0
  %834 = vmatpush1.msra.mxu0 0.0
  %835 = vmatprep.subr.mxu0 0.0
  %836 = vmatpush1.msra.mxu0 0.0
  %837 = vmatprep.subr.mxu0 0.0
  %838 = vmatpush1.msra.mxu0 0.0
  %839 = vmatprep.subr.mxu0 0.0
  %840 = vmatpush1.msra.mxu0 0.0
  %841 = vmatprep.subr.mxu0 0.0
  %842 = vmatpush1.msra.mxu0 0.0
  %843 = vmatprep.subr.mxu0 0.0
  %844 = vmatpush1.msra.mxu0 0.0
  %845 = vmatprep.subr.mxu0 0.0
  %846 = vmatpush1.msra.mxu0 0.0
  %847 = vmatprep.subr.mxu0 0.0
  %848 = vmatpush1.msra.mxu0 0.0
  %849 = vmatprep.subr.mxu0 0.0
  %850 = vmatpush1.msra.mxu0 0.0
  %851 = vmatprep.subr.mxu0 0.0
  %852 = vmatpush1.msra.mxu0 0.0
  %853 = vmatprep.subr.mxu0 0.0
  %854 = vmatpush1.msra.mxu0 0.0
  %855 = vmatprep.mubr.f32.mxu0 0.0
  %856 = vmatmul.mubr.f32.gmra.mrb[0].mxu0 %v780
  %v857 = vpop.f32.mrb[0].mxu0
  %v858 = vadd.f32 0.0, %v857
  %v859 = vpop.f32.mrb[0].mxu0
  %860 = vmatprep.mubr.f32.mxu0 0.0
  %861 = vmatmul.mubr.f32.gmra.mrb[0].mxu0 %v783
  %v862 = vpop.f32.mrb[0].mxu0
  %v863 = vadd.f32 0.0, %v862
  %v864 = vpop.f32.mrb[0].mxu0
  %865 = vmatprep.mubr.f32.mxu0 0.0
  %866 = vmatmul.mubr.f32.gmra.mrb[0].mxu0 %v786
  %v867 = vpop.f32.mrb[0].mxu0
  %v868 = vadd.f32 0.0, %v867
  %v869 = vpop.f32.mrb[0].mxu0
  %870 = vmatprep.mubr.f32.mxu0 0.0
  %871 = vmatmul.mubr.f32.gmra.mrb[0].mxu0 %v789
  %v872 = vpop.f32.mrb[0].mxu0
  %v873 = vadd.f32 0.0, %v872
  %v874 = vpop.f32.mrb[0].mxu0
  %875 = vdwg.mxu0
  %v876 = vadd.f32 %v759, %v858
  %v877 = vadd.f32 %v764, %v863
  %v878 = vadd.f32 %v769, %v868
  %v879 = vadd.f32 %v774, %v873
  %v880 = vld [vmem:[%s5] sm:$0x1]
  %v882 = vlaneseq
  %v883 = vshrl.u32 %v882, 7
  %v884 = vsub.s32 0, %v883
  %v885 = vrot.slane %v880, %v884
  %v887 = vadd.f32 %v876, %v885
  %v888 = vadd.f32 %v877, %v885
  %v889 = vadd.f32 %v878, %v885
  %v890 = vadd.f32 %v879, %v885
  %v891 = vmax.f32 %v887, 0.0
  %v892 = vmax.f32 %v888, 0.0
  %v893 = vmax.f32 %v889, 0.0
  %v894 = vmax.f32 %v890, 0.0
  %v895 = vadd.f32 %v891, %v149
  %v896 = vadd.f32 %v892, %v154
  %v897 = vadd.f32 %v893, %v159
  %v898 = vadd.f32 %v894, %v164
  %v899 = vmax.f32 %v895, 0.0
  %v900 = vmax.f32 %v896, 0.0
  %v901 = vmax.f32 %v897, 0.0
  %v902 = vmax.f32 %v898, 0.0
  %vm903 = vcmp.ge.s32.totalorder %v49, 4
  %vm904 = vcmp.ge.s32.totalorder %v50, 4
  %vm905 = vcmp.ge.s32.totalorder %v51, 4
  %vm906 = vcmp.ge.s32.totalorder %v52, 4
  %v907 = vrot.slane %v899, 4
  %v908 = vrot.slane %v900, 4
  %v909 = vrot.slane %v901, 4
  %v910 = vrot.slane %v902, 4
  %vm911 = vcmp.lt.s32.totalorder %v176, 4
  %v912 = vsel %vm911, %v909, %v910
  %v913 = vsel %vm911, %v908, %v909
  %v914 = vsel %vm911, %v907, %v908
  %v915 = vsel %vm911, %v910, %v907
  %v916 = vsel %vm903, 1, 0
  %v917 = vsel %vm904, 1, 0
  %v918 = vsel %vm905, 1, 0
  %v919 = vsel %vm906, 1, 0
  %920 = vset.pattern.permute.xlu0 0
  %921 = vperm.xlu0 %920, %v916
  %v922 = vpop.permute.xlu0 %921
  %923 = vset.pattern.permute.xlu0 0
  %924 = vperm.xlu0 %923, %v917
  %v925 = vpop.permute.xlu0 %924
  %926 = vset.pattern.permute.xlu0 0
  %927 = vperm.xlu0 %926, %v918
  %v928 = vpop.permute.xlu0 %927
  %929 = vset.pattern.permute.xlu0 0
  %930 = vperm.xlu0 %929, %v919
  %v931 = vpop.permute.xlu0 %930
  %vm932 = vcmp.eq.s32.totalorder %v922, 1
  %vm933 = vcmp.eq.s32.totalorder %v925, 1
  %vm934 = vcmp.eq.s32.totalorder %v928, 1
  %vm935 = vcmp.eq.s32.totalorder %v931, 1
  %v936 = vsel %vm932, %v915, 0.0
  %v937 = vsel %vm933, %v914, 0.0
  %v938 = vsel %vm934, %v913, 0.0
  %v939 = vsel %vm935, %v912, 0.0
  %v940 = vld [vmem:[%s8] sm:$0xff]
  %v941 = vrot.slane %v899, 6
  %v942 = vrot.slane %v900, 6
  %v943 = vrot.slane %v901, 6
  %v944 = vrot.slane %v902, 6
  %v945 = vsel %vm177, %v943, %v944
  %v946 = vsel %vm177, %v942, %v943
  %v947 = vsel %vm177, %v941, %v942
  %v948 = vsel %vm177, %v944, %v941
  %v949 = vsel %vm198, %v948, 0.0
  %v950 = vsel %vm199, %v947, 0.0
  %v951 = vsel %vm200, %v946, 0.0
  %v952 = vsel %vm201, %v945, 0.0
  %s953 = scalar_lea.vmem %s8, 8
  %v954 = vld [vmem:[%s953] sm:$0xff]
  %v956 = vsel %vm582, %v949, 0
  %v959 = vsel %vm582, %v950, 0
  %v962 = vsel %vm582, %v951, 0
  %v965 = vsel %vm582, %v952, 0
  %967 = vmatprep.subr.mxu0 0.0
  %968 = vmatpush1.msra.mxu0 %v954
  %969 = vmatprep.subr.mxu0 0.0
  %970 = vmatpush1.msra.mxu0 0.0
  %971 = vmatprep.subr.mxu0 0.0
  %972 = vmatpush1.msra.mxu0 0.0
  %973 = vmatprep.subr.mxu0 0.0
  %974 = vmatpush1.msra.mxu0 0.0
  %975 = vmatprep.subr.mxu0 0.0
  %976 = vmatpush1.msra.mxu0 0.0
  %977 = vmatprep.subr.mxu0 0.0
  %978 = vmatpush1.msra.mxu0 0.0
  %979 = vmatprep.subr.mxu0 0.0
  %980 = vmatpush1.msra.mxu0 0.0
  %981 = vmatprep.subr.mxu0 0.0
  %982 = vmatpush1.msra.mxu0 0.0
  %983 = vmatprep.subr.mxu0 0.0
  %984 = vmatpush1.msra.mxu0 0.0
  %985 = vmatprep.subr.mxu0 0.0
  %986 = vmatpush1.msra.mxu0 0.0
  %987 = vmatprep.subr.mxu0 0.0
  %988 = vmatpush1.msra.mxu0 0.0
  %989 = vmatprep.subr.mxu0 0.0
  %990 = vmatpush1.msra.mxu0 0.0
  %991 = vmatprep.subr.mxu0 0.0
  %992 = vmatpush1.msra.mxu0 0.0
  %993 = vmatprep.subr.mxu0 0.0
  %994 = vmatpush1.msra.mxu0 0.0
  %995 = vmatprep.subr.mxu0 0.0
  %996 = vmatpush1.msra.mxu0 0.0
  %997 = vmatprep.subr.mxu0 0.0
  %998 = vmatpush1.msra.mxu0 0.0
  %999 = vmatprep.subr.mxu0 0.0
  %1000 = vmatpush1.msra.mxu0 0.0
  %1001 = vmatprep.subr.mxu0 0.0
  %1002 = vmatpush1.msra.mxu0 0.0
  %1003 = vmatprep.subr.mxu0 0.0
  %1004 = vmatpush1.msra.mxu0 0.0
  %1005 = vmatprep.subr.mxu0 0.0
  %1006 = vmatpush1.msra.mxu0 0.0
  %1007 = vmatprep.subr.mxu0 0.0
  %1008 = vmatpush1.msra.mxu0 0.0
  %1009 = vmatprep.subr.mxu0 0.0
  %1010 = vmatpush1.msra.mxu0 0.0
  %1011 = vmatprep.subr.mxu0 0.0
  %1012 = vmatpush1.msra.mxu0 0.0
  %1013 = vmatprep.subr.mxu0 0.0
  %1014 = vmatpush1.msra.mxu0 0.0
  %1015 = vmatprep.subr.mxu0 0.0
  %1016 = vmatpush1.msra.mxu0 0.0
  %1017 = vmatprep.subr.mxu0 0.0
  %1018 = vmatpush1.msra.mxu0 0.0
  %1019 = vmatprep.subr.mxu0 0.0
  %1020 = vmatpush1.msra.mxu0 0.0
  %1021 = vmatprep.subr.mxu0 0.0
  %1022 = vmatpush1.msra.mxu0 0.0
  %1023 = vmatprep.subr.mxu0 0.0
  %1024 = vmatpush1.msra.mxu0 0.0
  %1025 = vmatprep.subr.mxu0 0.0
  %1026 = vmatpush1.msra.mxu0 0.0
  %1027 = vmatprep.subr.mxu0 0.0
  %1028 = vmatpush1.msra.mxu0 0.0
  %1029 = vmatprep.subr.mxu0 0.0
  %1030 = vmatpush1.msra.mxu0 0.0
  %1031 = vmatprep.mubr.f32.mxu0 0.0
  %1032 = vmatmul.mubr.f32.gmra.mrb[0].mxu0 %v956
  %v1033 = vpop.f32.mrb[0].mxu0
  %v1034 = vadd.f32 0.0, %v1033
  %v1035 = vpop.f32.mrb[0].mxu0
  %1036 = vmatprep.mubr.f32.mxu0 0.0
  %1037 = vmatmul.mubr.f32.gmra.mrb[0].mxu0 %v959
  %v1038 = vpop.f32.mrb[0].mxu0
  %v1039 = vadd.f32 0.0, %v1038
  %v1040 = vpop.f32.mrb[0].mxu0
  %1041 = vmatprep.mubr.f32.mxu0 0.0
  %1042 = vmatmul.mubr.f32.gmra.mrb[0].mxu0 %v962
  %v1043 = vpop.f32.mrb[0].mxu0
  %v1044 = vadd.f32 0.0, %v1043
  %v1045 = vpop.f32.mrb[0].mxu0
  %1046 = vmatprep.mubr.f32.mxu0 0.0
  %1047 = vmatmul.mubr.f32.gmra.mrb[0].mxu0 %v965
  %v1048 = vpop.f32.mrb[0].mxu0
  %v1049 = vadd.f32 0.0, %v1048
  %v1050 = vpop.f32.mrb[0].mxu0
  %1051 = vdwg.mxu0
  %v1053 = vsel %vm582, %v936, 0
  %v1056 = vsel %vm582, %v937, 0
  %v1059 = vsel %vm582, %v938, 0
  %v1062 = vsel %vm582, %v939, 0
  %1064 = vmatprep.subr.mxu0 0.0
  %1065 = vmatpush1.msra.mxu0 %v940
  %1066 = vmatprep.subr.mxu0 0.0
  %1067 = vmatpush1.msra.mxu0 0.0
  %1068 = vmatprep.subr.mxu0 0.0
  %1069 = vmatpush1.msra.mxu0 0.0
  %1070 = vmatprep.subr.mxu0 0.0
  %1071 = vmatpush1.msra.mxu0 0.0
  %1072 = vmatprep.subr.mxu0 0.0
  %1073 = vmatpush1.msra.mxu0 0.0
  %1074 = vmatprep.subr.mxu0 0.0
  %1075 = vmatpush1.msra.mxu0 0.0
  %1076 = vmatprep.subr.mxu0 0.0
  %1077 = vmatpush1.msra.mxu0 0.0
  %1078 = vmatprep.subr.mxu0 0.0
  %1079 = vmatpush1.msra.mxu0 0.0
  %1080 = vmatprep.subr.mxu0 0.0
  %1081 = vmatpush1.msra.mxu0 0.0
  %1082 = vmatprep.subr.mxu0 0.0
  %1083 = vmatpush1.msra.mxu0 0.0
  %1084 = vmatprep.subr.mxu0 0.0
  %1085 = vmatpush1.msra.mxu0 0.0
  %1086 = vmatprep.subr.mxu0 0.0
  %1087 = vmatpush1.msra.mxu0 0.0
  %1088 = vmatprep.subr.mxu0 0.0
  %1089 = vmatpush1.msra.mxu0 0.0
  %1090 = vmatprep.subr.mxu0 0.0
  %1091 = vmatpush1.msra.mxu0 0.0
  %1092 = vmatprep.subr.mxu0 0.0
  %1093 = vmatpush1.msra.mxu0 0.0
  %1094 = vmatprep.subr.mxu0 0.0
  %1095 = vmatpush1.msra.mxu0 0.0
  %1096 = vmatprep.subr.mxu0 0.0
  %1097 = vmatpush1.msra.mxu0 0.0
  %1098 = vmatprep.subr.mxu0 0.0
  %1099 = vmatpush1.msra.mxu0 0.0
  %1100 = vmatprep.subr.mxu0 0.0
  %1101 = vmatpush1.msra.mxu0 0.0
  %1102 = vmatprep.subr.mxu0 0.0
  %1103 = vmatpush1.msra.mxu0 0.0
  %1104 = vmatprep.subr.mxu0 0.0
  %1105 = vmatpush1.msra.mxu0 0.0
  %1106 = vmatprep.subr.mxu0 0.0
  %1107 = vmatpush1.msra.mxu0 0.0
  %1108 = vmatprep.subr.mxu0 0.0
  %1109 = vmatpush1.msra.mxu0 0.0
  %1110 = vmatprep.subr.mxu0 0.0
  %1111 = vmatpush1.msra.mxu0 0.0
  %1112 = vmatprep.subr.mxu0 0.0
  %1113 = vmatpush1.msra.mxu0 0.0
  %1114 = vmatprep.subr.mxu0 0.0
  %1115 = vmatpush1.msra.mxu0 0.0
  %1116 = vmatprep.subr.mxu0 0.0
  %1117 = vmatpush1.msra.mxu0 0.0
  %1118 = vmatprep.subr.mxu0 0.0
  %1119 = vmatpush1.msra.mxu0 0.0
  %1120 = vmatprep.subr.mxu0 0.0
  %1121 = vmatpush1.msra.mxu0 0.0
  %1122 = vmatprep.subr.mxu0 0.0
  %1123 = vmatpush1.msra.mxu0 0.0
  %1124 = vmatprep.subr.mxu0 0.0
  %1125 = vmatpush1.msra.mxu0 0.0
  %1126 = vmatprep.subr.mxu0 0.0
  %1127 = vmatpush1.msra.mxu0 0.0
  %1128 = vmatprep.mubr.f32.mxu0 0.0
  %1129 = vmatmul.mubr.f32.gmra.mrb[0].mxu0 %v1053
  %v1130 = vpop.f32.mrb[0].mxu0
  %v1131 = vadd.f32 %v1034, %v1130
  %v1132 = vpop.f32.mrb[0].mxu0
  %1133 = vmatprep.mubr.f32.mxu0 0.0
  %1134 = vmatmul.mubr.f32.gmra.mrb[0].mxu0 %v1056
  %v1135 = vpop.f32.mrb[0].mxu0
  %v1136 = vadd.f32 %v1039, %v1135
  %v1137 = vpop.f32.mrb[0].mxu0
  %1138 = vmatprep.mubr.f32.mxu0 0.0
  %1139 = vmatmul.mubr.f32.gmra.mrb[0].mxu0 %v1059
  %v1140 = vpop.f32.mrb[0].mxu0
  %v1141 = vadd.f32 %v1044, %v1140
  %v1142 = vpop.f32.mrb[0].mxu0
  %1143 = vmatprep.mubr.f32.mxu0 0.0
  %1144 = vmatmul.mubr.f32.gmra.mrb[0].mxu0 %v1062
  %v1145 = vpop.f32.mrb[0].mxu0
  %v1146 = vadd.f32 %v1049, %v1145
  %v1147 = vpop.f32.mrb[0].mxu0
  %1148 = vdwg.mxu0
  %s1149 = scalar_lea.vmem %s8, 16
  %v1150 = vld [vmem:[%s1149] sm:$0xff]
  %v1152 = vsel %vm582, %v899, 0
  %v1155 = vsel %vm582, %v900, 0
  %v1158 = vsel %vm582, %v901, 0
  %v1161 = vsel %vm582, %v902, 0
  %1163 = vmatprep.subr.mxu0 0.0
  %1164 = vmatpush1.msra.mxu0 %v1150
  %1165 = vmatprep.subr.mxu0 0.0
  %1166 = vmatpush1.msra.mxu0 0.0
  %1167 = vmatprep.subr.mxu0 0.0
  %1168 = vmatpush1.msra.mxu0 0.0
  %1169 = vmatprep.subr.mxu0 0.0
  %1170 = vmatpush1.msra.mxu0 0.0
  %1171 = vmatprep.subr.mxu0 0.0
  %1172 = vmatpush1.msra.mxu0 0.0
  %1173 = vmatprep.subr.mxu0 0.0
  %1174 = vmatpush1.msra.mxu0 0.0
  %1175 = vmatprep.subr.mxu0 0.0
  %1176 = vmatpush1.msra.mxu0 0.0
  %1177 = vmatprep.subr.mxu0 0.0
  %1178 = vmatpush1.msra.mxu0 0.0
  %1179 = vmatprep.subr.mxu0 0.0
  %1180 = vmatpush1.msra.mxu0 0.0
  %1181 = vmatprep.subr.mxu0 0.0
  %1182 = vmatpush1.msra.mxu0 0.0
  %1183 = vmatprep.subr.mxu0 0.0
  %1184 = vmatpush1.msra.mxu0 0.0
  %1185 = vmatprep.subr.mxu0 0.0
  %1186 = vmatpush1.msra.mxu0 0.0
  %1187 = vmatprep.subr.mxu0 0.0
  %1188 = vmatpush1.msra.mxu0 0.0
  %1189 = vmatprep.subr.mxu0 0.0
  %1190 = vmatpush1.msra.mxu0 0.0
  %1191 = vmatprep.subr.mxu0 0.0
  %1192 = vmatpush1.msra.mxu0 0.0
  %1193 = vmatprep.subr.mxu0 0.0
  %1194 = vmatpush1.msra.mxu0 0.0
  %1195 = vmatprep.subr.mxu0 0.0
  %1196 = vmatpush1.msra.mxu0 0.0
  %1197 = vmatprep.subr.mxu0 0.0
  %1198 = vmatpush1.msra.mxu0 0.0
  %1199 = vmatprep.subr.mxu0 0.0
  %1200 = vmatpush1.msra.mxu0 0.0
  %1201 = vmatprep.subr.mxu0 0.0
  %1202 = vmatpush1.msra.mxu0 0.0
  %1203 = vmatprep.subr.mxu0 0.0
  %1204 = vmatpush1.msra.mxu0 0.0
  %1205 = vmatprep.subr.mxu0 0.0
  %1206 = vmatpush1.msra.mxu0 0.0
  %1207 = vmatprep.subr.mxu0 0.0
  %1208 = vmatpush1.msra.mxu0 0.0
  %1209 = vmatprep.subr.mxu0 0.0
  %1210 = vmatpush1.msra.mxu0 0.0
  %1211 = vmatprep.subr.mxu0 0.0
  %1212 = vmatpush1.msra.mxu0 0.0
  %1213 = vmatprep.subr.mxu0 0.0
  %1214 = vmatpush1.msra.mxu0 0.0
  %1215 = vmatprep.subr.mxu0 0.0
  %1216 = vmatpush1.msra.mxu0 0.0
  %1217 = vmatprep.subr.mxu0 0.0
  %1218 = vmatpush1.msra.mxu0 0.0
  %1219 = vmatprep.subr.mxu0 0.0
  %1220 = vmatpush1.msra.mxu0 0.0
  %1221 = vmatprep.subr.mxu0 0.0
  %1222 = vmatpush1.msra.mxu0 0.0
  %1223 = vmatprep.subr.mxu0 0.0
  %1224 = vmatpush1.msra.mxu0 0.0
  %1225 = vmatprep.subr.mxu0 0.0
  %1226 = vmatpush1.msra.mxu0 0.0
  %1227 = vmatprep.mubr.f32.mxu0 0.0
  %1228 = vmatmul.mubr.f32.gmra.mrb[0].mxu0 %v1152
  %v1229 = vpop.f32.mrb[0].mxu0
  %v1230 = vadd.f32 0.0, %v1229
  %v1231 = vpop.f32.mrb[0].mxu0
  %1232 = vmatprep.mubr.f32.mxu0 0.0
  %1233 = vmatmul.mubr.f32.gmra.mrb[0].mxu0 %v1155
  %v1234 = vpop.f32.mrb[0].mxu0
  %v1235 = vadd.f32 0.0, %v1234
  %v1236 = vpop.f32.mrb[0].mxu0
  %1237 = vmatprep.mubr.f32.mxu0 0.0
  %1238 = vmatmul.mubr.f32.gmra.mrb[0].mxu0 %v1158
  %v1239 = vpop.f32.mrb[0].mxu0
  %v1240 = vadd.f32 0.0, %v1239
  %v1241 = vpop.f32.mrb[0].mxu0
  %1242 = vmatprep.mubr.f32.mxu0 0.0
  %1243 = vmatmul.mubr.f32.gmra.mrb[0].mxu0 %v1161
  %v1244 = vpop.f32.mrb[0].mxu0
  %v1245 = vadd.f32 0.0, %v1244
  %v1246 = vpop.f32.mrb[0].mxu0
  %1247 = vdwg.mxu0
  %v1248 = vadd.f32 %v1131, %v1230
  %v1249 = vadd.f32 %v1136, %v1235
  %v1250 = vadd.f32 %v1141, %v1240
  %v1251 = vadd.f32 %v1146, %v1245
  %v1252 = vld [vmem:[%s9] sm:$0x1]
  %v1254 = vlaneseq
  %v1255 = vshrl.u32 %v1254, 7
  %v1256 = vsub.s32 0, %v1255
  %v1257 = vrot.slane %v1252, %v1256
  %v1259 = vadd.f32 %v1248, %v1257
  %v1260 = vadd.f32 %v1249, %v1257
  %v1261 = vadd.f32 %v1250, %v1257
  %v1262 = vadd.f32 %v1251, %v1257
  %v1263 = vmax.f32 %v1259, 0.0
  %v1264 = vmax.f32 %v1260, 0.0
  %v1265 = vmax.f32 %v1261, 0.0
  %v1266 = vmax.f32 %v1262, 0.0
  %v1267 = vrot.slane %v1263, 4
  %v1268 = vrot.slane %v1264, 4
  %v1269 = vrot.slane %v1265, 4
  %v1270 = vrot.slane %v1266, 4
  %v1271 = vsel %vm911, %v1269, %v1270
  %v1272 = vsel %vm911, %v1268, %v1269
  %v1273 = vsel %vm911, %v1267, %v1268
  %v1274 = vsel %vm911, %v1270, %v1267
  %v1275 = vsel %vm932, %v1274, 0.0
  %v1276 = vsel %vm933, %v1273, 0.0
  %v1277 = vsel %vm934, %v1272, 0.0
  %v1278 = vsel %vm935, %v1271, 0.0
  %v1279 = vld [vmem:[%s10] sm:$0xff]
  %v1280 = vrot.slane %v1263, 6
  %v1281 = vrot.slane %v1264, 6
  %v1282 = vrot.slane %v1265, 6
  %v1283 = vrot.slane %v1266, 6
  %v1284 = vsel %vm177, %v1282, %v1283
  %v1285 = vsel %vm177, %v1281, %v1282
  %v1286 = vsel %vm177, %v1280, %v1281
  %v1287 = vsel %vm177, %v1283, %v1280
  %v1288 = vsel %vm198, %v1287, 0.0
  %v1289 = vsel %vm199, %v1286, 0.0
  %v1290 = vsel %vm200, %v1285, 0.0
  %v1291 = vsel %vm201, %v1284, 0.0
  %s1292 = scalar_lea.vmem %s10, 8
  %v1293 = vld [vmem:[%s1292] sm:$0xff]
  %v1295 = vsel %vm582, %v1288, 0
  %v1298 = vsel %vm582, %v1289, 0
  %v1301 = vsel %vm582, %v1290, 0
  %v1304 = vsel %vm582, %v1291, 0
  %1306 = vmatprep.subr.mxu0 0.0
  %1307 = vmatpush1.msra.mxu0 %v1293
  %1308 = vmatprep.subr.mxu0 0.0
  %1309 = vmatpush1.msra.mxu0 0.0
  %1310 = vmatprep.subr.mxu0 0.0
  %1311 = vmatpush1.msra.mxu0 0.0
  %1312 = vmatprep.subr.mxu0 0.0
  %1313 = vmatpush1.msra.mxu0 0.0
  %1314 = vmatprep.subr.mxu0 0.0
  %1315 = vmatpush1.msra.mxu0 0.0
  %1316 = vmatprep.subr.mxu0 0.0
  %1317 = vmatpush1.msra.mxu0 0.0
  %1318 = vmatprep.subr.mxu0 0.0
  %1319 = vmatpush1.msra.mxu0 0.0
  %1320 = vmatprep.subr.mxu0 0.0
  %1321 = vmatpush1.msra.mxu0 0.0
  %1322 = vmatprep.subr.mxu0 0.0
  %1323 = vmatpush1.msra.mxu0 0.0
  %1324 = vmatprep.subr.mxu0 0.0
  %1325 = vmatpush1.msra.mxu0 0.0
  %1326 = vmatprep.subr.mxu0 0.0
  %1327 = vmatpush1.msra.mxu0 0.0
  %1328 = vmatprep.subr.mxu0 0.0
  %1329 = vmatpush1.msra.mxu0 0.0
  %1330 = vmatprep.subr.mxu0 0.0
  %1331 = vmatpush1.msra.mxu0 0.0
  %1332 = vmatprep.subr.mxu0 0.0
  %1333 = vmatpush1.msra.mxu0 0.0
  %1334 = vmatprep.subr.mxu0 0.0
  %1335 = vmatpush1.msra.mxu0 0.0
  %1336 = vmatprep.subr.mxu0 0.0
  %1337 = vmatpush1.msra.mxu0 0.0
  %1338 = vmatprep.subr.mxu0 0.0
  %1339 = vmatpush1.msra.mxu0 0.0
  %1340 = vmatprep.subr.mxu0 0.0
  %1341 = vmatpush1.msra.mxu0 0.0
  %1342 = vmatprep.subr.mxu0 0.0
  %1343 = vmatpush1.msra.mxu0 0.0
  %1344 = vmatprep.subr.mxu0 0.0
  %1345 = vmatpush1.msra.mxu0 0.0
  %1346 = vmatprep.subr.mxu0 0.0
  %1347 = vmatpush1.msra.mxu0 0.0
  %1348 = vmatprep.subr.mxu0 0.0
  %1349 = vmatpush1.msra.mxu0 0.0
  %1350 = vmatprep.subr.mxu0 0.0
  %1351 = vmatpush1.msra.mxu0 0.0
  %1352 = vmatprep.subr.mxu0 0.0
  %1353 = vmatpush1.msra.mxu0 0.0
  %1354 = vmatprep.subr.mxu0 0.0
  %1355 = vmatpush1.msra.mxu0 0.0
  %1356 = vmatprep.subr.mxu0 0.0
  %1357 = vmatpush1.msra.mxu0 0.0
  %1358 = vmatprep.subr.mxu0 0.0
  %1359 = vmatpush1.msra.mxu0 0.0
  %1360 = vmatprep.subr.mxu0 0.0
  %1361 = vmatpush1.msra.mxu0 0.0
  %1362 = vmatprep.subr.mxu0 0.0
  %1363 = vmatpush1.msra.mxu0 0.0
  %1364 = vmatprep.subr.mxu0 0.0
  %1365 = vmatpush1.msra.mxu0 0.0
  %1366 = vmatprep.subr.mxu0 0.0
  %1367 = vmatpush1.msra.mxu0 0.0
  %1368 = vmatprep.subr.mxu0 0.0
  %1369 = vmatpush1.msra.mxu0 0.0
  %1370 = vmatprep.mubr.f32.mxu0 0.0
  %1371 = vmatmul.mubr.f32.gmra.mrb[0].mxu0 %v1295
  %v1372 = vpop.f32.mrb[0].mxu0
  %v1373 = vadd.f32 0.0, %v1372
  %v1374 = vpop.f32.mrb[0].mxu0
  %1375 = vmatprep.mubr.f32.mxu0 0.0
  %1376 = vmatmul.mubr.f32.gmra.mrb[0].mxu0 %v1298
  %v1377 = vpop.f32.mrb[0].mxu0
  %v1378 = vadd.f32 0.0, %v1377
  %v1379 = vpop.f32.mrb[0].mxu0
  %1380 = vmatprep.mubr.f32.mxu0 0.0
  %1381 = vmatmul.mubr.f32.gmra.mrb[0].mxu0 %v1301
  %v1382 = vpop.f32.mrb[0].mxu0
  %v1383 = vadd.f32 0.0, %v1382
  %v1384 = vpop.f32.mrb[0].mxu0
  %1385 = vmatprep.mubr.f32.mxu0 0.0
  %1386 = vmatmul.mubr.f32.gmra.mrb[0].mxu0 %v1304
  %v1387 = vpop.f32.mrb[0].mxu0
  %v1388 = vadd.f32 0.0, %v1387
  %v1389 = vpop.f32.mrb[0].mxu0
  %1390 = vdwg.mxu0
  %v1392 = vsel %vm582, %v1275, 0
  %v1395 = vsel %vm582, %v1276, 0
  %v1398 = vsel %vm582, %v1277, 0
  %v1401 = vsel %vm582, %v1278, 0
  %1403 = vmatprep.subr.mxu0 0.0
  %1404 = vmatpush1.msra.mxu0 %v1279
  %1405 = vmatprep.subr.mxu0 0.0
  %1406 = vmatpush1.msra.mxu0 0.0
  %1407 = vmatprep.subr.mxu0 0.0
  %1408 = vmatpush1.msra.mxu0 0.0
  %1409 = vmatprep.subr.mxu0 0.0
  %1410 = vmatpush1.msra.mxu0 0.0
  %1411 = vmatprep.subr.mxu0 0.0
  %1412 = vmatpush1.msra.mxu0 0.0
  %1413 = vmatprep.subr.mxu0 0.0
  %1414 = vmatpush1.msra.mxu0 0.0
  %1415 = vmatprep.subr.mxu0 0.0
  %1416 = vmatpush1.msra.mxu0 0.0
  %1417 = vmatprep.subr.mxu0 0.0
  %1418 = vmatpush1.msra.mxu0 0.0
  %1419 = vmatprep.subr.mxu0 0.0
  %1420 = vmatpush1.msra.mxu0 0.0
  %1421 = vmatprep.subr.mxu0 0.0
  %1422 = vmatpush1.msra.mxu0 0.0
  %1423 = vmatprep.subr.mxu0 0.0
  %1424 = vmatpush1.msra.mxu0 0.0
  %1425 = vmatprep.subr.mxu0 0.0
  %1426 = vmatpush1.msra.mxu0 0.0
  %1427 = vmatprep.subr.mxu0 0.0
  %1428 = vmatpush1.msra.mxu0 0.0
  %1429 = vmatprep.subr.mxu0 0.0
  %1430 = vmatpush1.msra.mxu0 0.0
  %1431 = vmatprep.subr.mxu0 0.0
  %1432 = vmatpush1.msra.mxu0 0.0
  %1433 = vmatprep.subr.mxu0 0.0
  %1434 = vmatpush1.msra.mxu0 0.0
  %1435 = vmatprep.subr.mxu0 0.0
  %1436 = vmatpush1.msra.mxu0 0.0
  %1437 = vmatprep.subr.mxu0 0.0
  %1438 = vmatpush1.msra.mxu0 0.0
  %1439 = vmatprep.subr.mxu0 0.0
  %1440 = vmatpush1.msra.mxu0 0.0
  %1441 = vmatprep.subr.mxu0 0.0
  %1442 = vmatpush1.msra.mxu0 0.0
  %1443 = vmatprep.subr.mxu0 0.0
  %1444 = vmatpush1.msra.mxu0 0.0
  %1445 = vmatprep.subr.mxu0 0.0
  %1446 = vmatpush1.msra.mxu0 0.0
  %1447 = vmatprep.subr.mxu0 0.0
  %1448 = vmatpush1.msra.mxu0 0.0
  %1449 = vmatprep.subr.mxu0 0.0
  %1450 = vmatpush1.msra.mxu0 0.0
  %1451 = vmatprep.subr.mxu0 0.0
  %1452 = vmatpush1.msra.mxu0 0.0
  %1453 = vmatprep.subr.mxu0 0.0
  %1454 = vmatpush1.msra.mxu0 0.0
  %1455 = vmatprep.subr.mxu0 0.0
  %1456 = vmatpush1.msra.mxu0 0.0
  %1457 = vmatprep.subr.mxu0 0.0
  %1458 = vmatpush1.msra.mxu0 0.0
  %1459 = vmatprep.subr.mxu0 0.0
  %1460 = vmatpush1.msra.mxu0 0.0
  %1461 = vmatprep.subr.mxu0 0.0
  %1462 = vmatpush1.msra.mxu0 0.0
  %1463 = vmatprep.subr.mxu0 0.0
  %1464 = vmatpush1.msra.mxu0 0.0
  %1465 = vmatprep.subr.mxu0 0.0
  %1466 = vmatpush1.msra.mxu0 0.0
  %1467 = vmatprep.mubr.f32.mxu0 0.0
  %1468 = vmatmul.mubr.f32.gmra.mrb[0].mxu0 %v1392
  %v1469 = vpop.f32.mrb[0].mxu0
  %v1470 = vadd.f32 %v1373, %v1469
  %v1471 = vpop.f32.mrb[0].mxu0
  %1472 = vmatprep.mubr.f32.mxu0 0.0
  %1473 = vmatmul.mubr.f32.gmra.mrb[0].mxu0 %v1395
  %v1474 = vpop.f32.mrb[0].mxu0
  %v1475 = vadd.f32 %v1378, %v1474
  %v1476 = vpop.f32.mrb[0].mxu0
  %1477 = vmatprep.mubr.f32.mxu0 0.0
  %1478 = vmatmul.mubr.f32.gmra.mrb[0].mxu0 %v1398
  %v1479 = vpop.f32.mrb[0].mxu0
  %v1480 = vadd.f32 %v1383, %v1479
  %v1481 = vpop.f32.mrb[0].mxu0
  %1482 = vmatprep.mubr.f32.mxu0 0.0
  %1483 = vmatmul.mubr.f32.gmra.mrb[0].mxu0 %v1401
  %v1484 = vpop.f32.mrb[0].mxu0
  %v1485 = vadd.f32 %v1388, %v1484
  %v1486 = vpop.f32.mrb[0].mxu0
  %1487 = vdwg.mxu0
  %s1488 = scalar_lea.vmem %s10, 16
  %v1489 = vld [vmem:[%s1488] sm:$0xff]
  %v1491 = vsel %vm582, %v1263, 0
  %v1494 = vsel %vm582, %v1264, 0
  %v1497 = vsel %vm582, %v1265, 0
  %v1500 = vsel %vm582, %v1266, 0
  %1502 = vmatprep.subr.mxu0 0.0
  %1503 = vmatpush1.msra.mxu0 %v1489
  %1504 = vmatprep.subr.mxu0 0.0
  %1505 = vmatpush1.msra.mxu0 0.0
  %1506 = vmatprep.subr.mxu0 0.0
  %1507 = vmatpush1.msra.mxu0 0.0
  %1508 = vmatprep.subr.mxu0 0.0
  %1509 = vmatpush1.msra.mxu0 0.0
  %1510 = vmatprep.subr.mxu0 0.0
  %1511 = vmatpush1.msra.mxu0 0.0
  %1512 = vmatprep.subr.mxu0 0.0
  %1513 = vmatpush1.msra.mxu0 0.0
  %1514 = vmatprep.subr.mxu0 0.0
  %1515 = vmatpush1.msra.mxu0 0.0
  %1516 = vmatprep.subr.mxu0 0.0
  %1517 = vmatpush1.msra.mxu0 0.0
  %1518 = vmatprep.subr.mxu0 0.0
  %1519 = vmatpush1.msra.mxu0 0.0
  %1520 = vmatprep.subr.mxu0 0.0
  %1521 = vmatpush1.msra.mxu0 0.0
  %1522 = vmatprep.subr.mxu0 0.0
  %1523 = vmatpush1.msra.mxu0 0.0
  %1524 = vmatprep.subr.mxu0 0.0
  %1525 = vmatpush1.msra.mxu0 0.0
  %1526 = vmatprep.subr.mxu0 0.0
  %1527 = vmatpush1.msra.mxu0 0.0
  %1528 = vmatprep.subr.mxu0 0.0
  %1529 = vmatpush1.msra.mxu0 0.0
  %1530 = vmatprep.subr.mxu0 0.0
  %1531 = vmatpush1.msra.mxu0 0.0
  %1532 = vmatprep.subr.mxu0 0.0
  %1533 = vmatpush1.msra.mxu0 0.0
  %1534 = vmatprep.subr.mxu0 0.0
  %1535 = vmatpush1.msra.mxu0 0.0
  %1536 = vmatprep.subr.mxu0 0.0
  %1537 = vmatpush1.msra.mxu0 0.0
  %1538 = vmatprep.subr.mxu0 0.0
  %1539 = vmatpush1.msra.mxu0 0.0
  %1540 = vmatprep.subr.mxu0 0.0
  %1541 = vmatpush1.msra.mxu0 0.0
  %1542 = vmatprep.subr.mxu0 0.0
  %1543 = vmatpush1.msra.mxu0 0.0
  %1544 = vmatprep.subr.mxu0 0.0
  %1545 = vmatpush1.msra.mxu0 0.0
  %1546 = vmatprep.subr.mxu0 0.0
  %1547 = vmatpush1.msra.mxu0 0.0
  %1548 = vmatprep.subr.mxu0 0.0
  %1549 = vmatpush1.msra.mxu0 0.0
  %1550 = vmatprep.subr.mxu0 0.0
  %1551 = vmatpush1.msra.mxu0 0.0
  %1552 = vmatprep.subr.mxu0 0.0
  %1553 = vmatpush1.msra.mxu0 0.0
  %1554 = vmatprep.subr.mxu0 0.0
  %1555 = vmatpush1.msra.mxu0 0.0
  %1556 = vmatprep.subr.mxu0 0.0
  %1557 = vmatpush1.msra.mxu0 0.0
  %1558 = vmatprep.subr.mxu0 0.0
  %1559 = vmatpush1.msra.mxu0 0.0
  %1560 = vmatprep.subr.mxu0 0.0
  %1561 = vmatpush1.msra.mxu0 0.0
  %1562 = vmatprep.subr.mxu0 0.0
  %1563 = vmatpush1.msra.mxu0 0.0
  %1564 = vmatprep.subr.mxu0 0.0
  %1565 = vmatpush1.msra.mxu0 0.0
  %1566 = vmatprep.mubr.f32.mxu0 0.0
  %1567 = vmatmul.mubr.f32.gmra.mrb[0].mxu0 %v1491
  %v1568 = vpop.f32.mrb[0].mxu0
  %v1569 = vadd.f32 0.0, %v1568
  %v1570 = vpop.f32.mrb[0].mxu0
  %1571 = vmatprep.mubr.f32.mxu0 0.0
  %1572 = vmatmul.mubr.f32.gmra.mrb[0].mxu0 %v1494
  %v1573 = vpop.f32.mrb[0].mxu0
  %v1574 = vadd.f32 0.0, %v1573
  %v1575 = vpop.f32.mrb[0].mxu0
  %1576 = vmatprep.mubr.f32.mxu0 0.0
  %1577 = vmatmul.mubr.f32.gmra.mrb[0].mxu0 %v1497
  %v1578 = vpop.f32.mrb[0].mxu0
  %v1579 = vadd.f32 0.0, %v1578
  %v1580 = vpop.f32.mrb[0].mxu0
  %1581 = vmatprep.mubr.f32.mxu0 0.0
  %1582 = vmatmul.mubr.f32.gmra.mrb[0].mxu0 %v1500
  %v1583 = vpop.f32.mrb[0].mxu0
  %v1584 = vadd.f32 0.0, %v1583
  %v1585 = vpop.f32.mrb[0].mxu0
  %1586 = vdwg.mxu0
  %v1587 = vadd.f32 %v1470, %v1569
  %v1588 = vadd.f32 %v1475, %v1574
  %v1589 = vadd.f32 %v1480, %v1579
  %v1590 = vadd.f32 %v1485, %v1584
  %v1591 = vld [vmem:[%s11] sm:$0x1]
  %v1593 = vlaneseq
  %v1594 = vshrl.u32 %v1593, 7
  %v1595 = vsub.s32 0, %v1594
  %v1596 = vrot.slane %v1591, %v1595
  %v1598 = vadd.f32 %v1587, %v1596
  %v1599 = vadd.f32 %v1588, %v1596
  %v1600 = vadd.f32 %v1589, %v1596
  %v1601 = vadd.f32 %v1590, %v1596
  %v1602 = vmax.f32 %v1598, 0.0
  %v1603 = vmax.f32 %v1599, 0.0
  %v1604 = vmax.f32 %v1600, 0.0
  %v1605 = vmax.f32 %v1601, 0.0
  %v1606 = vadd.f32 %v1602, %v899
  %v1607 = vadd.f32 %v1603, %v900
  %v1608 = vadd.f32 %v1604, %v901
  %v1609 = vadd.f32 %v1605, %v902
  %v1610 = vmax.f32 %v1606, 0.0
  %v1611 = vmax.f32 %v1607, 0.0
  %v1612 = vmax.f32 %v1608, 0.0
  %v1613 = vmax.f32 %v1609, 0.0
  %v1614 = vlaneseq
  %v1615 = vand.u32 %v1614, 127
  %v1616 = vmul.u32 %v176, 16
  %v1617 = vadd.s32 %v1616, 15
  %vm1618 = vcmp.eq.s32.totalorder %v1615, %v1617
  %v1619 = vsel %vm1618, 1, 0
  %v1620 = vcvt.s32.f32 %v1619
  %vm1621 = vcmask 261120
  %v1623 = vsel %vm1621, %v1620, 0
  %1625 = vmatprep.subr.mxu0 0.0
  %1626 = vmatpush1.msra.mxu0 %v1610
  %1627 = vmatprep.subr.mxu0 0.0
  %1628 = vmatpush1.msra.mxu0 %v1611
  %1629 = vmatprep.subr.mxu0 0.0
  %1630 = vmatpush1.msra.mxu0 %v1612
  %1631 = vmatprep.subr.mxu0 0.0
  %1632 = vmatpush1.msra.mxu0 %v1613
  %1633 = vmatprep.subr.mxu0 0.0
  %1634 = vmatpush1.msra.mxu0 0.0
  %1635 = vmatprep.subr.mxu0 0.0
  %1636 = vmatpush1.msra.mxu0 0.0
  %1637 = vmatprep.subr.mxu0 0.0
  %1638 = vmatpush1.msra.mxu0 0.0
  %1639 = vmatprep.subr.mxu0 0.0
  %1640 = vmatpush1.msra.mxu0 0.0
  %1641 = vmatprep.subr.mxu0 0.0
  %1642 = vmatpush1.msra.mxu0 0.0
  %1643 = vmatprep.subr.mxu0 0.0
  %1644 = vmatpush1.msra.mxu0 0.0
  %1645 = vmatprep.subr.mxu0 0.0
  %1646 = vmatpush1.msra.mxu0 0.0
  %1647 = vmatprep.subr.mxu0 0.0
  %1648 = vmatpush1.msra.mxu0 0.0
  %1649 = vmatprep.subr.mxu0 0.0
  %1650 = vmatpush1.msra.mxu0 0.0
  %1651 = vmatprep.subr.mxu0 0.0
  %1652 = vmatpush1.msra.mxu0 0.0
  %1653 = vmatprep.subr.mxu0 0.0
  %1654 = vmatpush1.msra.mxu0 0.0
  %1655 = vmatprep.subr.mxu0 0.0
  %1656 = vmatpush1.msra.mxu0 0.0
  %1657 = vmatprep.subr.mxu0 0.0
  %1658 = vmatpush1.msra.mxu0 0.0
  %1659 = vmatprep.subr.mxu0 0.0
  %1660 = vmatpush1.msra.mxu0 0.0
  %1661 = vmatprep.subr.mxu0 0.0
  %1662 = vmatpush1.msra.mxu0 0.0
  %1663 = vmatprep.subr.mxu0 0.0
  %1664 = vmatpush1.msra.mxu0 0.0
  %1665 = vmatprep.subr.mxu0 0.0
  %1666 = vmatpush1.msra.mxu0 0.0
  %1667 = vmatprep.subr.mxu0 0.0
  %1668 = vmatpush1.msra.mxu0 0.0
  %1669 = vmatprep.subr.mxu0 0.0
  %1670 = vmatpush1.msra.mxu0 0.0
  %1671 = vmatprep.subr.mxu0 0.0
  %1672 = vmatpush1.msra.mxu0 0.0
  %1673 = vmatprep.subr.mxu0 0.0
  %1674 = vmatpush1.msra.mxu0 0.0
  %1675 = vmatprep.subr.mxu0 0.0
  %1676 = vmatpush1.msra.mxu0 0.0
  %1677 = vmatprep.subr.mxu0 0.0
  %1678 = vmatpush1.msra.mxu0 0.0
  %1679 = vmatprep.subr.mxu0 0.0
  %1680 = vmatpush1.msra.mxu0 0.0
  %1681 = vmatprep.subr.mxu0 0.0
  %1682 = vmatpush1.msra.mxu0 0.0
  %1683 = vmatprep.subr.mxu0 0.0
  %1684 = vmatpush1.msra.mxu0 0.0
  %1685 = vmatprep.subr.mxu0 0.0
  %1686 = vmatpush1.msra.mxu0 0.0
  %1687 = vmatprep.subr.mxu0 0.0
  %1688 = vmatpush1.msra.mxu0 0.0
  %1689 = vmatprep.mubr.f32.mxu0 0.0
  %1690 = vmatmul.mubr.f32.gmra.mrb[0].mxu0 %v1623
  %v1691 = vpop.f32.mrb[0].mxu0
  %v1692 = vadd.f32 0.0, %v1691
  %v1693 = vpop.f32.mrb[0].mxu0
  %1694 = vdwg.mxu0
  %v1695 = vld [vmem:[%s12] sm:$0xff]
  %v1696 = vld [vmem:[#allocation2] sm:$0x1]
  %v1698 = vlaneseq
  %v1699 = vshrl.u32 %v1698, 7
  %v1700 = vsub.s32 0, %v1699
  %v1701 = vrot.slane %v1696, %v1700
  %v1704 = vsel %vm582, %v1692, 0
  %1706 = vmatprep.subr.mxu0 0.0
  %1707 = vmatpush1.msra.mxu0 %v1695
  %1708 = vmatprep.subr.mxu0 0.0
  %1709 = vmatpush1.msra.mxu0 0.0
  %1710 = vmatprep.subr.mxu0 0.0
  %1711 = vmatpush1.msra.mxu0 0.0
  %1712 = vmatprep.subr.mxu0 0.0
  %1713 = vmatpush1.msra.mxu0 0.0
  %1714 = vmatprep.subr.mxu0 0.0
  %1715 = vmatpush1.msra.mxu0 0.0
  %1716 = vmatprep.subr.mxu0 0.0
  %1717 = vmatpush1.msra.mxu0 0.0
  %1718 = vmatprep.subr.mxu0 0.0
  %1719 = vmatpush1.msra.mxu0 0.0
  %1720 = vmatprep.subr.mxu0 0.0
  %1721 = vmatpush1.msra.mxu0 0.0
  %1722 = vmatprep.subr.mxu0 0.0
  %1723 = vmatpush1.msra.mxu0 0.0
  %1724 = vmatprep.subr.mxu0 0.0
  %1725 = vmatpush1.msra.mxu0 0.0
  %1726 = vmatprep.subr.mxu0 0.0
  %1727 = vmatpush1.msra.mxu0 0.0
  %1728 = vmatprep.subr.mxu0 0.0
  %1729 = vmatpush1.msra.mxu0 0.0
  %1730 = vmatprep.subr.mxu0 0.0
  %1731 = vmatpush1.msra.mxu0 0.0
  %1732 = vmatprep.subr.mxu0 0.0
  %1733 = vmatpush1.msra.mxu0 0.0
  %1734 = vmatprep.subr.mxu0 0.0
  %1735 = vmatpush1.msra.mxu0 0.0
  %1736 = vmatprep.subr.mxu0 0.0
  %1737 = vmatpush1.msra.mxu0 0.0
  %1738 = vmatprep.subr.mxu0 0.0
  %1739 = vmatpush1.msra.mxu0 0.0
  %1740 = vmatprep.subr.mxu0 0.0
  %1741 = vmatpush1.msra.mxu0 0.0
  %1742 = vmatprep.subr.mxu0 0.0
  %1743 = vmatpush1.msra.mxu0 0.0
  %1744 = vmatprep.subr.mxu0 0.0
  %1745 = vmatpush1.msra.mxu0 0.0
  %1746 = vmatprep.subr.mxu0 0.0
  %1747 = vmatpush1.msra.mxu0 0.0
  %1748 = vmatprep.subr.mxu0 0.0
  %1749 = vmatpush1.msra.mxu0 0.0
  %1750 = vmatprep.subr.mxu0 0.0
  %1751 = vmatpush1.msra.mxu0 0.0
  %1752 = vmatprep.subr.mxu0 0.0
  %1753 = vmatpush1.msra.mxu0 0.0
  %1754 = vmatprep.subr.mxu0 0.0
  %1755 = vmatpush1.msra.mxu0 0.0
  %1756 = vmatprep.subr.mxu0 0.0
  %1757 = vmatpush1.msra.mxu0 0.0
  %1758 = vmatprep.subr.mxu0 0.0
  %1759 = vmatpush1.msra.mxu0 0.0
  %1760 = vmatprep.subr.mxu0 0.0
  %1761 = vmatpush1.msra.mxu0 0.0
  %1762 = vmatprep.subr.mxu0 0.0
  %1763 = vmatpush1.msra.mxu0 0.0
  %1764 = vmatprep.subr.mxu0 0.0
  %1765 = vmatpush1.msra.mxu0 0.0
  %1766 = vmatprep.subr.mxu0 0.0
  %1767 = vmatpush1.msra.mxu0 0.0
  %1768 = vmatprep.subr.mxu0 0.0
  %1769 = vmatpush1.msra.mxu0 0.0
  %1770 = vmatprep.mubr.f32.mxu0 0.0
  %1771 = vmatmul.mubr.f32.gmra.mrb[0].mxu0 %v1704
  %v1772 = vpop.f32.mrb[0].mxu0
  %v1773 = vadd.f32 %v1701, %v1772
  %v1774 = vpop.f32.mrb[0].mxu0
  %1775 = vdwg.mxu0
  %vm1776 = vcmask 1024
  %1777 = vst.msk [vmem:[%s14] sm:$0x3] %vm1776, %v1773
  // Predicated region
  $region58: #{tcn_forward.1} parent=0 // pred_check
    _
  $region59: #{tcn_forward.1} parent=0 // pred_check_branch
    %1779 = sbr.rel (0) target = $region61
  $region60: #{tcn_forward.1} parent=0 // pred_region
    _
  $region61: #{tcn_forward.1} parent=0 // pred_fallthru
    _
  // Predicated region
  $region62: #{tcn_forward.1} parent=0 // pred_check
    _
  $region63: #{tcn_forward.1} parent=0 // pred_check_branch
    %1781 = sbr.rel (0) target = $region65
  $region64: #{tcn_forward.1} parent=0 // pred_region
    _
  $region65: #{tcn_forward.1} parent=0 // pred_fallthru
    _

</llo_original>
